<compile_context>
chip_gen: v7x
topology: tpu7x:2x2x1
jax: 0.10.0
libtpu: 0.0.40
codegen_flags: <defaults>
</compile_context>

<pallas_src>
import math
from functools import partial

import jax
import jax.numpy as jnp
from jax.experimental import pallas as pl
from jax.experimental.pallas import tpu as pltpu


def block_kernel(x_ref,
                 ln1_g_ref, ln1_b_ref,
                 wqkv_ref,
                 wp_ref, bp_ref,
                 ln2_g_ref, ln2_b_ref,
                 w1_ref, b1_ref,
                 w2_ref, b2_ref,
                 o_ref,
                 attn_scratch,
                 *, num_heads):
    Bt, N, C = x_ref.shape
    T = Bt * N
    hd = C // num_heads
    eps = 1e-5                      # torch.nn.LayerNorm default
    mm_dtype = wqkv_ref.dtype       # bf16 or f32 MXU operands, f32 accumulation

    x = x_ref[...].reshape(T, C)    # leading-dim reshape only (trivial layout)

    def layernorm(z, g, b):
        mu = jnp.mean(z, axis=-1, keepdims=True)
        var = jnp.mean((z - mu) ** 2, axis=-1, keepdims=True)
        return (z - mu) * jax.lax.rsqrt(var + eps) * g + b     # g, b: (1, C)

    def mm(a, w_ref):
        w = w_ref[...]
        return jnp.dot(a.astype(w.dtype), w, preferred_element_type=jnp.float32)

    # ---------------- attention ----------------
    xn = layernorm(x, ln1_g_ref[...], ln1_b_ref[...])
    qkv = mm(xn, wqkv_ref)                       # (T, 3C); scale folded into Q
    qkv = qkv.reshape(Bt, N, 3 * C)              # leading-dim split only

    for h in range(num_heads):                   # static unroll over heads
        q_h = qkv[:, :, h * hd:(h + 1) * hd].astype(mm_dtype)
        k_h = qkv[:, :, C + h * hd:C + (h + 1) * hd].astype(mm_dtype)
        v_h = qkv[:, :, 2 * C + h * hd:2 * C + (h + 1) * hd].astype(mm_dtype)
        s = jnp.einsum('bqd,bkd->bqk', q_h, k_h,
                       preferred_element_type=jnp.float32)       # (Bt, N, N)
        s = s - jnp.max(s, axis=-1, keepdims=True)
        p = jnp.exp(s)
        p = p * pl.reciprocal(jnp.sum(p, axis=-1, keepdims=True), approx=True)
        o_h = jnp.einsum('bqk,bkd->bqd', p.astype(mm_dtype), v_h,
                         preferred_element_type=jnp.float32)     # (Bt, N, hd)
        attn_scratch[:, :, h * hd:(h + 1) * hd] = o_h            # static lane offsets

    attn = attn_scratch[...].reshape(T, C)
    attn = mm(attn, wp_ref) + bp_ref[...]
    x1 = x + attn                                # residual 1

    # ---------------- MLP ----------------
    xn2 = layernorm(x1, ln2_g_ref[...], ln2_b_ref[...])
    h1 = mm(xn2, w1_ref) + b1_ref[...]
    # exact GELU (erf form), matching torch.nn.GELU default
    h1 = 0.5 * h1 * (1.0 + jax.lax.erf(h1 * (1.0 / math.sqrt(2.0))))
    h2 = mm(h1, w2_ref) + b2_ref[...]

    o_ref[...] = (x1 + h2).reshape(Bt, N, C).astype(o_ref.dtype)  # residual 2


def prep_params(raw, num_heads, weight_dtype=jnp.float32):
    """Fold attention scale into Wq, fuse Q/K/V into one (C, 3C) weight, and
    optionally cast matmul weights to bf16 (LayerNorm params/biases stay f32)."""
    C = raw["wq"].shape[0]
    scale = (C // num_heads) ** (-0.5)
    wqkv = jnp.concatenate([raw["wq"] * scale, raw["wk"], raw["wv"]], axis=1)
    return {
        "ln1_g": raw["ln1_g"], "ln1_b": raw["ln1_b"],
        "wqkv": wqkv.astype(weight_dtype),
        "wp": raw["wp"].astype(weight_dtype), "bp": raw["bp"],
        "ln2_g": raw["ln2_g"], "ln2_b": raw["ln2_b"],
        "w1": raw["w1"].astype(weight_dtype), "b1": raw["b1"],
        "w2": raw["w2"].astype(weight_dtype), "b2": raw["b2"],
    }


def _pick_block_b(B, N, C, H, budget_bytes=6 << 20):
    """Largest batch tile that fits an activation budget, while keeping at
    least two grid steps so both TensorCores (v7x) / megacore stay busy."""
    per_b = N * (14 * C + 5 * H) * 4            # rough f32 activation bytes
    bt = max(1, min(B, budget_bytes // max(per_b, 1)))
    if B >= 2:
        bt = min(bt, B // 2)
    while bt > 1 and B % bt:
        bt -= 1
    return max(bt, 1)


def transformer_block(x, params, num_heads, block_b=None):
    B, N, C = x.shape
    H = params["w1"].shape[1]
    if block_b is None:
        block_b = _pick_block_b(B, N, C, H)
    assert B % block_b == 0, "block_b must divide batch"
    grid = (B // block_b,)

    # Scoped VMEM limit sized from the real footprint (weights are
    # double-buffered by default; in/out slabs + intermediates on top).
    w_bytes = sum(int(params[k].size) * params[k].dtype.itemsize
                  for k in ("wqkv", "wp", "w1", "w2"))
    slab = block_b * N * C * 4
    acts = block_b * N * (4 * C + 3 * C + H) * 4
    vmem_limit = int(min(64 << 20, max(16 << 20, 2 * w_bytes + 4 * slab + 2 * acts)))

    def const_spec(shape):
        n = len(shape)
        return pl.BlockSpec(shape, lambda b, n=n: (0,) * n)

    kernel = partial(block_kernel, num_heads=num_heads)
    return pl.pallas_call(
        kernel,
        out_shape=jax.ShapeDtypeStruct((B, N, C), x.dtype),
        grid=grid,
        in_specs=[
            pl.BlockSpec((block_b, N, C), lambda b: (b, 0, 0)),  # x
            const_spec((1, C)), const_spec((1, C)),              # ln1 gamma/beta
            const_spec((C, 3 * C)),                              # fused Wqkv (Q scaled)
            const_spec((C, C)), const_spec((1, C)),              # Wproj, bproj
            const_spec((1, C)), const_spec((1, C)),              # ln2 gamma/beta
            const_spec((C, H)), const_spec((1, H)),              # fc1
            const_spec((H, C)), const_spec((1, C)),              # fc2
        ],
        out_specs=pl.BlockSpec((block_b, N, C), lambda b: (b, 0, 0)),
        scratch_shapes=[pltpu.VMEM((block_b, N, C), jnp.float32)],
        compiler_params=pltpu.CompilerParams(
            dimension_semantics=("parallel",),
            vmem_limit_bytes=vmem_limit),
    )(x,
      params["ln1_g"], params["ln1_b"],
      params["wqkv"],
      params["wp"], params["bp"],
      params["ln2_g"], params["ln2_b"],
      params["w1"], params["b1"],
      params["w2"], params["b2"])


def reference_block(x, params, num_heads):
    """Pure-JAX reference mirroring the PyTorch forward pass (raw params)."""
    B, N, C = x.shape
    hd = C // num_heads
    scale = hd ** (-0.5)
    eps = 1e-5

    def ln(z, g, b):
        mu = jnp.mean(z, -1, keepdims=True)
        var = jnp.mean((z - mu) ** 2, -1, keepdims=True)
        return (z - mu) / jnp.sqrt(var + eps) * g + b

    xn = ln(x, params["ln1_g"], params["ln1_b"])
    q = (xn @ params["wq"]) * scale
    k = xn @ params["wk"]
    v = xn @ params["wv"]
    q = q.reshape(B, N, num_heads, hd).transpose(0, 2, 1, 3)
    k = k.reshape(B, N, num_heads, hd).transpose(0, 2, 1, 3)
    v = v.reshape(B, N, num_heads, hd).transpose(0, 2, 1, 3)
    a = jax.nn.softmax(q @ k.transpose(0, 1, 3, 2), axis=-1)
    o = (a @ v).transpose(0, 2, 1, 3).reshape(B, N, C)
    o = o @ params["wp"] + params["bp"]
    x = x + o

    xn2 = ln(x, params["ln2_g"], params["ln2_b"])
    h = xn2 @ params["w1"] + params["b1"]
    h = jax.nn.gelu(h, approximate=False)
    h = h @ params["w2"] + params["b2"]
    return x + h


if __name__ == "__main__":
    # Small shapes: dim=32, heads=4 (head_dim=8), mlp_ratio=4 -> hidden=128
    B, N, C = 2, 8, 32
    num_heads = 4
    H = 4 * C

    key = jax.random.PRNGKey(0)
    keys = jax.random.split(key, 8)
    s = 0.02
    # qkv weight in torch is (3C, C) with y = x @ W.T ; split into q/k/v and
    # store transposed so kernel does x @ w.
    w_qkv = s * jax.random.normal(keys[0], (3 * C, C), jnp.float32)
    raw = {
        "ln1_g": jnp.ones((1, C), jnp.float32),
        "ln1_b": jnp.zeros((1, C), jnp.float32),
        "wq": w_qkv[0 * C:1 * C, :].T,
        "wk": w_qkv[1 * C:2 * C, :].T,
        "wv": w_qkv[2 * C:3 * C, :].T,
        "wp": s * jax.random.normal(keys[1], (C, C), jnp.float32),
        "bp": s * jax.random.normal(keys[2], (1, C), jnp.float32),
        "ln2_g": jnp.ones((1, C), jnp.float32),
        "ln2_b": jnp.zeros((1, C), jnp.float32),
        "w1": s * jax.random.normal(keys[3], (C, H), jnp.float32),
        "b1": s * jax.random.normal(keys[4], (1, H), jnp.float32),
        "w2": s * jax.random.normal(keys[5], (H, C), jnp.float32),
        "b2": s * jax.random.normal(keys[6], (1, C), jnp.float32),
    }
    x = jax.random.normal(keys[7], (B, N, C), jnp.float32)
    ref = reference_block(x, raw, num_heads)

    # f32 weight path (tight tolerance; approx softmax reciprocal only delta)
    p32 = prep_params(raw, num_heads, jnp.float32)
    out = jax.block_until_ready(transformer_block(x, p32, num_heads))
    assert out.shape == (B, N, C)
    err32 = float(jnp.max(jnp.abs(out - ref)))
    assert err32 < 1e-3, f"f32 mismatch vs reference: {err32}"

    # bf16 weight path (v6e/v7x MXU-rate / VMEM-halving option), f32 accum
    pbf = prep_params(raw, num_heads, jnp.bfloat16)
    out_bf = jax.block_until_ready(transformer_block(x, pbf, num_heads))
    errbf = float(jnp.max(jnp.abs(out_bf - ref)))
    assert errbf < 2e-2, f"bf16 mismatch vs reference: {errbf}"

    print("KERNEL_OK")
</pallas_src>

<mosaic_0001>
module attributes {stable_mosaic.version = 11 : i64} {
  func.func @block_kernel(%arg0: i32, %arg1: memref<1x8x32xf32, #tpu.memory_space<vmem>>, %arg2: memref<1x32xf32, #tpu.memory_space<vmem>>, %arg3: memref<1x32xf32, #tpu.memory_space<vmem>>, %arg4: memref<32x96xf32, #tpu.memory_space<vmem>>, %arg5: memref<32x32xf32, #tpu.memory_space<vmem>>, %arg6: memref<1x32xf32, #tpu.memory_space<vmem>>, %arg7: memref<1x32xf32, #tpu.memory_space<vmem>>, %arg8: memref<1x32xf32, #tpu.memory_space<vmem>>, %arg9: memref<32x128xf32, #tpu.memory_space<vmem>>, %arg10: memref<1x128xf32, #tpu.memory_space<vmem>>, %arg11: memref<128x32xf32, #tpu.memory_space<vmem>>, %arg12: memref<1x32xf32, #tpu.memory_space<vmem>>, %arg13: memref<1x8x32xf32, #tpu.memory_space<vmem>>, %arg14: memref<1x8x32xf32, #tpu.memory_space<vmem>>) attributes {dimension_semantics = [#tpu.dimension_semantics<parallel>], iteration_bounds = array<i64: 2>, scalar_prefetch = 0 : i64, scratch_operands = 1 : i64, tpu.core_type = #tpu.core_type<tc>, window_params = [{transform_indices = @transform_0, window_bounds = array<i64: 1, 8, 32>}, {pipeline_mode = #tpu.pipeline_mode<synchronous>, transform_indices = @transform_1, window_bounds = array<i64: 1, 32>}, {pipeline_mode = #tpu.pipeline_mode<synchronous>, transform_indices = @transform_2, window_bounds = array<i64: 1, 32>}, {pipeline_mode = #tpu.pipeline_mode<synchronous>, transform_indices = @transform_3, window_bounds = array<i64: 32, 96>}, {pipeline_mode = #tpu.pipeline_mode<synchronous>, transform_indices = @transform_4, window_bounds = array<i64: 32, 32>}, {pipeline_mode = #tpu.pipeline_mode<synchronous>, transform_indices = @transform_5, window_bounds = array<i64: 1, 32>}, {pipeline_mode = #tpu.pipeline_mode<synchronous>, transform_indices = @transform_6, window_bounds = array<i64: 1, 32>}, {pipeline_mode = #tpu.pipeline_mode<synchronous>, transform_indices = @transform_7, window_bounds = array<i64: 1, 32>}, {pipeline_mode = #tpu.pipeline_mode<synchronous>, transform_indices = @transform_8, window_bounds = array<i64: 32, 128>}, {pipeline_mode = #tpu.pipeline_mode<synchronous>, transform_indices = @transform_9, window_bounds = array<i64: 1, 128>}, {pipeline_mode = #tpu.pipeline_mode<synchronous>, transform_indices = @transform_10, window_bounds = array<i64: 128, 32>}, {pipeline_mode = #tpu.pipeline_mode<synchronous>, transform_indices = @transform_11, window_bounds = array<i64: 1, 32>}, {transform_indices = @transform_12, window_bounds = array<i64: 1, 8, 32>}]} {
    %c0 = arith.constant 0 : index
    %c0_0 = arith.constant 0 : index
    %c0_1 = arith.constant 0 : index
    %0 = vector.load %arg1[%c0, %c0_0, %c0_1] : memref<1x8x32xf32, #tpu.memory_space<vmem>>, vector<1x8x32xf32>
    %1 = vector.shape_cast %0 : vector<1x8x32xf32> to vector<8x32xf32>
    %c0_2 = arith.constant 0 : index
    %c0_3 = arith.constant 0 : index
    %2 = vector.load %arg2[%c0_2, %c0_3] : memref<1x32xf32, #tpu.memory_space<vmem>>, vector<1x32xf32>
    %c0_4 = arith.constant 0 : index
    %c0_5 = arith.constant 0 : index
    %3 = vector.load %arg3[%c0_4, %c0_5] : memref<1x32xf32, #tpu.memory_space<vmem>>, vector<1x32xf32>
    %cst = arith.constant dense<0.000000e+00> : vector<8xf32>
    %4 = vector.multi_reduction <add>, %1, %cst [1] : vector<8x32xf32> to vector<8xf32>
    %5 = vector.shape_cast %4 : vector<8xf32> to vector<8x1xf32>
    %cst_6 = arith.constant 3.200000e+01 : f32
    %6 = vector.broadcast %cst_6 : f32 to vector<8x1xf32>
    %7 = arith.divf %5, %6 : vector<8x1xf32>
    %8 = vector.broadcast %7 : vector<8x1xf32> to vector<8x32xf32>
    %9 = arith.subf %1, %8 : vector<8x32xf32>
    %10 = arith.mulf %9, %9 : vector<8x32xf32>
    %cst_7 = arith.constant dense<0.000000e+00> : vector<8xf32>
    %11 = vector.multi_reduction <add>, %10, %cst_7 [1] : vector<8x32xf32> to vector<8xf32>
    %12 = vector.shape_cast %11 : vector<8xf32> to vector<8x1xf32>
    %cst_8 = arith.constant 3.200000e+01 : f32
    %13 = vector.broadcast %cst_8 : f32 to vector<8x1xf32>
    %14 = arith.divf %12, %13 : vector<8x1xf32>
    %15 = vector.broadcast %7 : vector<8x1xf32> to vector<8x32xf32>
    %16 = arith.subf %1, %15 : vector<8x32xf32>
    %cst_9 = arith.constant 9.99999974E-6 : f32
    %17 = vector.broadcast %cst_9 : f32 to vector<8x1xf32>
    %18 = arith.addf %14, %17 : vector<8x1xf32>
    %19 = math.rsqrt %18 : vector<8x1xf32>
    %20 = vector.broadcast %19 : vector<8x1xf32> to vector<8x32xf32>
    %21 = arith.mulf %16, %20 : vector<8x32xf32>
    %22 = vector.broadcast %2 : vector<1x32xf32> to vector<8x32xf32>
    %23 = arith.mulf %21, %22 : vector<8x32xf32>
    %24 = vector.broadcast %3 : vector<1x32xf32> to vector<8x32xf32>
    %25 = arith.addf %23, %24 : vector<8x32xf32>
    %c0_10 = arith.constant 0 : index
    %c0_11 = arith.constant 0 : index
    %26 = vector.load %arg4[%c0_10, %c0_11] : memref<32x96xf32, #tpu.memory_space<vmem>>, vector<32x96xf32>
    %cst_12 = arith.constant dense<0.000000e+00> : vector<8x96xf32>
    %27 = tpu.matmul %25, %26, %cst_12 {dimension_numbers = #tpu.dot_dimension_numbers<[1], [0], [0], [1], [0, 0, 1, 1], [], []>} : vector<8x32xf32>, vector<32x96xf32>, vector<8x96xf32> -> vector<8x96xf32>
    %28 = vector.shape_cast %27 : vector<8x96xf32> to vector<1x8x96xf32>
    %29 = vector.extract_strided_slice %28 {offsets = [0, 0, 0], sizes = [1, 8, 8], strides = [1, 1, 1]} : vector<1x8x96xf32> to vector<1x8x8xf32>
    %30 = vector.extract_strided_slice %28 {offsets = [0, 0, 32], sizes = [1, 8, 8], strides = [1, 1, 1]} : vector<1x8x96xf32> to vector<1x8x8xf32>
    %31 = vector.extract_strided_slice %28 {offsets = [0, 0, 64], sizes = [1, 8, 8], strides = [1, 1, 1]} : vector<1x8x96xf32> to vector<1x8x8xf32>
    "tpu.trace_start"() <{level = 10 : i32, message = "bqd,bkd->bqk"}> : () -> ()
    %cst_13 = arith.constant dense<0.000000e+00> : vector<1x8x8xf32>
    %32 = tpu.matmul %29, %30, %cst_13 {dimension_numbers = #tpu.dot_dimension_numbers<[2], [2], [1], [1], [0, 0, 0, 1, 1, 1], [0], [0]>} : vector<1x8x8xf32>, vector<1x8x8xf32>, vector<1x8x8xf32> -> vector<1x8x8xf32>
    "tpu.trace_stop"() : () -> ()
    %cst_14 = arith.constant dense<0xFF800000> : vector<1x8xf32>
    %33 = vector.multi_reduction <maximumf>, %32, %cst_14 [2] : vector<1x8x8xf32> to vector<1x8xf32>
    %34 = vector.shape_cast %33 : vector<1x8xf32> to vector<1x8x1xf32>
    %35 = vector.broadcast %34 : vector<1x8x1xf32> to vector<1x8x8xf32>
    %36 = arith.subf %32, %35 : vector<1x8x8xf32>
    %37 = math.exp %36 : vector<1x8x8xf32>
    %cst_15 = arith.constant dense<0.000000e+00> : vector<1x8xf32>
    %38 = vector.multi_reduction <add>, %37, %cst_15 [2] : vector<1x8x8xf32> to vector<1x8xf32>
    %39 = vector.shape_cast %38 : vector<1x8xf32> to vector<1x8x1xf32>
    %40 = tpu.reciprocal %39 {approx = true} : vector<1x8x1xf32> -> vector<1x8x1xf32>
    %41 = vector.broadcast %40 : vector<1x8x1xf32> to vector<1x8x8xf32>
    %42 = arith.mulf %37, %41 : vector<1x8x8xf32>
    "tpu.trace_start"() <{level = 10 : i32, message = "bqk,bkd->bqd"}> : () -> ()
    %cst_16 = arith.constant dense<0.000000e+00> : vector<1x8x8xf32>
    %43 = tpu.matmul %42, %31, %cst_16 {dimension_numbers = #tpu.dot_dimension_numbers<[2], [1], [1], [2], [0, 0, 0, 1, 1, 2], [0], [0]>} : vector<1x8x8xf32>, vector<1x8x8xf32>, vector<1x8x8xf32> -> vector<1x8x8xf32>
    "tpu.trace_stop"() : () -> ()
    %c0_17 = arith.constant 0 : index
    %c0_18 = arith.constant 0 : index
    %c0_19 = arith.constant 0 : index
    %44 = vector.load %arg14[%c0_17, %c0_18, %c0_19] : memref<1x8x32xf32, #tpu.memory_space<vmem>>, vector<1x8x8xf32>
    tpu.vector_store %arg14[%c0_17, %c0_18, %c0_19], %43 {strides = array<i32>} : memref<1x8x32xf32, #tpu.memory_space<vmem>>, vector<1x8x8xf32>,
    %45 = vector.extract_strided_slice %28 {offsets = [0, 0, 8], sizes = [1, 8, 8], strides = [1, 1, 1]} : vector<1x8x96xf32> to vector<1x8x8xf32>
    %46 = vector.extract_strided_slice %28 {offsets = [0, 0, 40], sizes = [1, 8, 8], strides = [1, 1, 1]} : vector<1x8x96xf32> to vector<1x8x8xf32>
    %47 = vector.extract_strided_slice %28 {offsets = [0, 0, 72], sizes = [1, 8, 8], strides = [1, 1, 1]} : vector<1x8x96xf32> to vector<1x8x8xf32>
    "tpu.trace_start"() <{level = 10 : i32, message = "bqd,bkd->bqk"}> : () -> ()
    %cst_20 = arith.constant dense<0.000000e+00> : vector<1x8x8xf32>
    %48 = tpu.matmul %45, %46, %cst_20 {dimension_numbers = #tpu.dot_dimension_numbers<[2], [2], [1], [1], [0, 0, 0, 1, 1, 1], [0], [0]>} : vector<1x8x8xf32>, vector<1x8x8xf32>, vector<1x8x8xf32> -> vector<1x8x8xf32>
    "tpu.trace_stop"() : () -> ()
    %cst_21 = arith.constant dense<0xFF800000> : vector<1x8xf32>
    %49 = vector.multi_reduction <maximumf>, %48, %cst_21 [2] : vector<1x8x8xf32> to vector<1x8xf32>
    %50 = vector.shape_cast %49 : vector<1x8xf32> to vector<1x8x1xf32>
    %51 = vector.broadcast %50 : vector<1x8x1xf32> to vector<1x8x8xf32>
    %52 = arith.subf %48, %51 : vector<1x8x8xf32>
    %53 = math.exp %52 : vector<1x8x8xf32>
    %cst_22 = arith.constant dense<0.000000e+00> : vector<1x8xf32>
    %54 = vector.multi_reduction <add>, %53, %cst_22 [2] : vector<1x8x8xf32> to vector<1x8xf32>
    %55 = vector.shape_cast %54 : vector<1x8xf32> to vector<1x8x1xf32>
    %56 = tpu.reciprocal %55 {approx = true} : vector<1x8x1xf32> -> vector<1x8x1xf32>
    %57 = vector.broadcast %56 : vector<1x8x1xf32> to vector<1x8x8xf32>
    %58 = arith.mulf %53, %57 : vector<1x8x8xf32>
    "tpu.trace_start"() <{level = 10 : i32, message = "bqk,bkd->bqd"}> : () -> ()
    %cst_23 = arith.constant dense<0.000000e+00> : vector<1x8x8xf32>
    %59 = tpu.matmul %58, %47, %cst_23 {dimension_numbers = #tpu.dot_dimension_numbers<[2], [1], [1], [2], [0, 0, 0, 1, 1, 2], [0], [0]>} : vector<1x8x8xf32>, vector<1x8x8xf32>, vector<1x8x8xf32> -> vector<1x8x8xf32>
    "tpu.trace_stop"() : () -> ()
    %c0_24 = arith.constant 0 : index
    %c0_25 = arith.constant 0 : index
    %c8 = arith.constant 8 : index
    %60 = vector.load %arg14[%c0_24, %c0_25, %c8] : memref<1x8x32xf32, #tpu.memory_space<vmem>>, vector<1x8x8xf32>
    tpu.vector_store %arg14[%c0_24, %c0_25, %c8], %59 {strides = array<i32>} : memref<1x8x32xf32, #tpu.memory_space<vmem>>, vector<1x8x8xf32>,
    %61 = vector.extract_strided_slice %28 {offsets = [0, 0, 16], sizes = [1, 8, 8], strides = [1, 1, 1]} : vector<1x8x96xf32> to vector<1x8x8xf32>
    %62 = vector.extract_strided_slice %28 {offsets = [0, 0, 48], sizes = [1, 8, 8], strides = [1, 1, 1]} : vector<1x8x96xf32> to vector<1x8x8xf32>
    %63 = vector.extract_strided_slice %28 {offsets = [0, 0, 80], sizes = [1, 8, 8], strides = [1, 1, 1]} : vector<1x8x96xf32> to vector<1x8x8xf32>
    "tpu.trace_start"() <{level = 10 : i32, message = "bqd,bkd->bqk"}> : () -> ()
    %cst_26 = arith.constant dense<0.000000e+00> : vector<1x8x8xf32>
    %64 = tpu.matmul %61, %62, %cst_26 {dimension_numbers = #tpu.dot_dimension_numbers<[2], [2], [1], [1], [0, 0, 0, 1, 1, 1], [0], [0]>} : vector<1x8x8xf32>, vector<1x8x8xf32>, vector<1x8x8xf32> -> vector<1x8x8xf32>
    "tpu.trace_stop"() : () -> ()
    %cst_27 = arith.constant dense<0xFF800000> : vector<1x8xf32>
    %65 = vector.multi_reduction <maximumf>, %64, %cst_27 [2] : vector<1x8x8xf32> to vector<1x8xf32>
    %66 = vector.shape_cast %65 : vector<1x8xf32> to vector<1x8x1xf32>
    %67 = vector.broadcast %66 : vector<1x8x1xf32> to vector<1x8x8xf32>
    %68 = arith.subf %64, %67 : vector<1x8x8xf32>
    %69 = math.exp %68 : vector<1x8x8xf32>
    %cst_28 = arith.constant dense<0.000000e+00> : vector<1x8xf32>
    %70 = vector.multi_reduction <add>, %69, %cst_28 [2] : vector<1x8x8xf32> to vector<1x8xf32>
    %71 = vector.shape_cast %70 : vector<1x8xf32> to vector<1x8x1xf32>
    %72 = tpu.reciprocal %71 {approx = true} : vector<1x8x1xf32> -> vector<1x8x1xf32>
    %73 = vector.broadcast %72 : vector<1x8x1xf32> to vector<1x8x8xf32>
    %74 = arith.mulf %69, %73 : vector<1x8x8xf32>
    "tpu.trace_start"() <{level = 10 : i32, message = "bqk,bkd->bqd"}> : () -> ()
    %cst_29 = arith.constant dense<0.000000e+00> : vector<1x8x8xf32>
    %75 = tpu.matmul %74, %63, %cst_29 {dimension_numbers = #tpu.dot_dimension_numbers<[2], [1], [1], [2], [0, 0, 0, 1, 1, 2], [0], [0]>} : vector<1x8x8xf32>, vector<1x8x8xf32>, vector<1x8x8xf32> -> vector<1x8x8xf32>
    "tpu.trace_stop"() : () -> ()
    %c0_30 = arith.constant 0 : index
    %c0_31 = arith.constant 0 : index
    %c16 = arith.constant 16 : index
    %76 = vector.load %arg14[%c0_30, %c0_31, %c16] : memref<1x8x32xf32, #tpu.memory_space<vmem>>, vector<1x8x8xf32>
    tpu.vector_store %arg14[%c0_30, %c0_31, %c16], %75 {strides = array<i32>} : memref<1x8x32xf32, #tpu.memory_space<vmem>>, vector<1x8x8xf32>,
    %77 = vector.extract_strided_slice %28 {offsets = [0, 0, 24], sizes = [1, 8, 8], strides = [1, 1, 1]} : vector<1x8x96xf32> to vector<1x8x8xf32>
    %78 = vector.extract_strided_slice %28 {offsets = [0, 0, 56], sizes = [1, 8, 8], strides = [1, 1, 1]} : vector<1x8x96xf32> to vector<1x8x8xf32>
    %79 = vector.extract_strided_slice %28 {offsets = [0, 0, 88], sizes = [1, 8, 8], strides = [1, 1, 1]} : vector<1x8x96xf32> to vector<1x8x8xf32>
    "tpu.trace_start"() <{level = 10 : i32, message = "bqd,bkd->bqk"}> : () -> ()
    %cst_32 = arith.constant dense<0.000000e+00> : vector<1x8x8xf32>
    %80 = tpu.matmul %77, %78, %cst_32 {dimension_numbers = #tpu.dot_dimension_numbers<[2], [2], [1], [1], [0, 0, 0, 1, 1, 1], [0], [0]>} : vector<1x8x8xf32>, vector<1x8x8xf32>, vector<1x8x8xf32> -> vector<1x8x8xf32>
    "tpu.trace_stop"() : () -> ()
    %cst_33 = arith.constant dense<0xFF800000> : vector<1x8xf32>
    %81 = vector.multi_reduction <maximumf>, %80, %cst_33 [2] : vector<1x8x8xf32> to vector<1x8xf32>
    %82 = vector.shape_cast %81 : vector<1x8xf32> to vector<1x8x1xf32>
    %83 = vector.broadcast %82 : vector<1x8x1xf32> to vector<1x8x8xf32>
    %84 = arith.subf %80, %83 : vector<1x8x8xf32>
    %85 = math.exp %84 : vector<1x8x8xf32>
    %cst_34 = arith.constant dense<0.000000e+00> : vector<1x8xf32>
    %86 = vector.multi_reduction <add>, %85, %cst_34 [2] : vector<1x8x8xf32> to vector<1x8xf32>
    %87 = vector.shape_cast %86 : vector<1x8xf32> to vector<1x8x1xf32>
    %88 = tpu.reciprocal %87 {approx = true} : vector<1x8x1xf32> -> vector<1x8x1xf32>
    %89 = vector.broadcast %88 : vector<1x8x1xf32> to vector<1x8x8xf32>
    %90 = arith.mulf %85, %89 : vector<1x8x8xf32>
    "tpu.trace_start"() <{level = 10 : i32, message = "bqk,bkd->bqd"}> : () -> ()
    %cst_35 = arith.constant dense<0.000000e+00> : vector<1x8x8xf32>
    %91 = tpu.matmul %90, %79, %cst_35 {dimension_numbers = #tpu.dot_dimension_numbers<[2], [1], [1], [2], [0, 0, 0, 1, 1, 2], [0], [0]>} : vector<1x8x8xf32>, vector<1x8x8xf32>, vector<1x8x8xf32> -> vector<1x8x8xf32>
    "tpu.trace_stop"() : () -> ()
    %c0_36 = arith.constant 0 : index
    %c0_37 = arith.constant 0 : index
    %c24 = arith.constant 24 : index
    %92 = vector.load %arg14[%c0_36, %c0_37, %c24] : memref<1x8x32xf32, #tpu.memory_space<vmem>>, vector<1x8x8xf32>
    tpu.vector_store %arg14[%c0_36, %c0_37, %c24], %91 {strides = array<i32>} : memref<1x8x32xf32, #tpu.memory_space<vmem>>, vector<1x8x8xf32>,
    %c0_38 = arith.constant 0 : index
    %c0_39 = arith.constant 0 : index
    %c0_40 = arith.constant 0 : index
    %93 = vector.load %arg14[%c0_38, %c0_39, %c0_40] : memref<1x8x32xf32, #tpu.memory_space<vmem>>, vector<1x8x32xf32>
    %94 = vector.shape_cast %93 : vector<1x8x32xf32> to vector<8x32xf32>
    %c0_41 = arith.constant 0 : index
    %c0_42 = arith.constant 0 : index
    %95 = vector.load %arg5[%c0_41, %c0_42] : memref<32x32xf32, #tpu.memory_space<vmem>>, vector<32x32xf32>
    %cst_43 = arith.constant dense<0.000000e+00> : vector<8x32xf32>
    %96 = tpu.matmul %94, %95, %cst_43 {dimension_numbers = #tpu.dot_dimension_numbers<[1], [0], [0], [1], [0, 0, 1, 1], [], []>} : vector<8x32xf32>, vector<32x32xf32>, vector<8x32xf32> -> vector<8x32xf32>
    %c0_44 = arith.constant 0 : index
    %c0_45 = arith.constant 0 : index
    %97 = vector.load %arg6[%c0_44, %c0_45] : memref<1x32xf32, #tpu.memory_space<vmem>>, vector<1x32xf32>
    %98 = vector.broadcast %97 : vector<1x32xf32> to vector<8x32xf32>
    %99 = arith.addf %96, %98 : vector<8x32xf32>
    %100 = arith.addf %1, %99 : vector<8x32xf32>
    %c0_46 = arith.constant 0 : index
    %c0_47 = arith.constant 0 : index
    %101 = vector.load %arg7[%c0_46, %c0_47] : memref<1x32xf32, #tpu.memory_space<vmem>>, vector<1x32xf32>
    %c0_48 = arith.constant 0 : index
    %c0_49 = arith.constant 0 : index
    %102 = vector.load %arg8[%c0_48, %c0_49] : memref<1x32xf32, #tpu.memory_space<vmem>>, vector<1x32xf32>
    %cst_50 = arith.constant dense<0.000000e+00> : vector<8xf32>
    %103 = vector.multi_reduction <add>, %100, %cst_50 [1] : vector<8x32xf32> to vector<8xf32>
    %104 = vector.shape_cast %103 : vector<8xf32> to vector<8x1xf32>
    %cst_51 = arith.constant 3.200000e+01 : f32
    %105 = vector.broadcast %cst_51 : f32 to vector<8x1xf32>
    %106 = arith.divf %104, %105 : vector<8x1xf32>
    %107 = vector.broadcast %106 : vector<8x1xf32> to vector<8x32xf32>
    %108 = arith.subf %100, %107 : vector<8x32xf32>
    %109 = arith.mulf %108, %108 : vector<8x32xf32>
    %cst_52 = arith.constant dense<0.000000e+00> : vector<8xf32>
    %110 = vector.multi_reduction <add>, %109, %cst_52 [1] : vector<8x32xf32> to vector<8xf32>
    %111 = vector.shape_cast %110 : vector<8xf32> to vector<8x1xf32>
    %cst_53 = arith.constant 3.200000e+01 : f32
    %112 = vector.broadcast %cst_53 : f32 to vector<8x1xf32>
    %113 = arith.divf %111, %112 : vector<8x1xf32>
    %114 = vector.broadcast %106 : vector<8x1xf32> to vector<8x32xf32>
    %115 = arith.subf %100, %114 : vector<8x32xf32>
    %cst_54 = arith.constant 9.99999974E-6 : f32
    %116 = vector.broadcast %cst_54 : f32 to vector<8x1xf32>
    %117 = arith.addf %113, %116 : vector<8x1xf32>
    %118 = math.rsqrt %117 : vector<8x1xf32>
    %119 = vector.broadcast %118 : vector<8x1xf32> to vector<8x32xf32>
    %120 = arith.mulf %115, %119 : vector<8x32xf32>
    %121 = vector.broadcast %101 : vector<1x32xf32> to vector<8x32xf32>
    %122 = arith.mulf %120, %121 : vector<8x32xf32>
    %123 = vector.broadcast %102 : vector<1x32xf32> to vector<8x32xf32>
    %124 = arith.addf %122, %123 : vector<8x32xf32>
    %c0_55 = arith.constant 0 : index
    %c0_56 = arith.constant 0 : index
    %125 = vector.load %arg9[%c0_55, %c0_56] : memref<32x128xf32, #tpu.memory_space<vmem>>, vector<32x128xf32>
    %cst_57 = arith.constant dense<0.000000e+00> : vector<8x128xf32>
    %126 = tpu.matmul %124, %125, %cst_57 {dimension_numbers = #tpu.dot_dimension_numbers<[1], [0], [0], [1], [0, 0, 1, 1], [], []>} : vector<8x32xf32>, vector<32x128xf32>, vector<8x128xf32> -> vector<8x128xf32>
    %c0_58 = arith.constant 0 : index
    %c0_59 = arith.constant 0 : index
    %127 = vector.load %arg10[%c0_58, %c0_59] : memref<1x128xf32, #tpu.memory_space<vmem>>, vector<1x128xf32>
    %128 = vector.broadcast %127 : vector<1x128xf32> to vector<8x128xf32>
    %129 = arith.addf %126, %128 : vector<8x128xf32>
    %cst_60 = arith.constant 5.000000e-01 : f32
    %130 = vector.broadcast %cst_60 : f32 to vector<8x128xf32>
    %131 = arith.mulf %130, %129 : vector<8x128xf32>
    %cst_61 = arith.constant 0.707106769 : f32
    %132 = vector.broadcast %cst_61 : f32 to vector<8x128xf32>
    %133 = arith.mulf %129, %132 : vector<8x128xf32>
    %134 = math.erf %133 : vector<8x128xf32>
    %cst_62 = arith.constant 1.000000e+00 : f32
    %135 = vector.broadcast %cst_62 : f32 to vector<8x128xf32>
    %136 = arith.addf %135, %134 : vector<8x128xf32>
    %137 = arith.mulf %131, %136 : vector<8x128xf32>
    %c0_63 = arith.constant 0 : index
    %c0_64 = arith.constant 0 : index
    %138 = vector.load %arg11[%c0_63, %c0_64] : memref<128x32xf32, #tpu.memory_space<vmem>>, vector<128x32xf32>
    %cst_65 = arith.constant dense<0.000000e+00> : vector<8x32xf32>
    %139 = tpu.matmul %137, %138, %cst_65 {dimension_numbers = #tpu.dot_dimension_numbers<[1], [0], [0], [1], [0, 0, 1, 1], [], []>} : vector<8x128xf32>, vector<128x32xf32>, vector<8x32xf32> -> vector<8x32xf32>
    %c0_66 = arith.constant 0 : index
    %c0_67 = arith.constant 0 : index
    %140 = vector.load %arg12[%c0_66, %c0_67] : memref<1x32xf32, #tpu.memory_space<vmem>>, vector<1x32xf32>
    %141 = vector.broadcast %140 : vector<1x32xf32> to vector<8x32xf32>
    %142 = arith.addf %139, %141 : vector<8x32xf32>
    %143 = arith.addf %100, %142 : vector<8x32xf32>
    %144 = vector.shape_cast %143 : vector<8x32xf32> to vector<1x8x32xf32>
    %c0_68 = arith.constant 0 : index
    %c0_69 = arith.constant 0 : index
    %c0_70 = arith.constant 0 : index
    %145 = vector.load %arg13[%c0_68, %c0_69, %c0_70] : memref<1x8x32xf32, #tpu.memory_space<vmem>>, vector<1x8x32xf32>
    tpu.vector_store %arg13[%c0_68, %c0_69, %c0_70], %144 {strides = array<i32>} : memref<1x8x32xf32, #tpu.memory_space<vmem>>, vector<1x8x32xf32>,
    return
  }
  func.func @transform_0(%arg0: i32) -> (i32, i32, i32) {
    %c0_i32 = arith.constant 0 : i32
    %c0_i32_0 = arith.constant 0 : i32
    %c0_i32_1 = arith.constant 0 : i32
    return %arg0, %c0_i32, %c0_i32_0 : i32, i32, i32
  }
  func.func @transform_1(%arg0: i32) -> (i32, i32) {
    %c0_i32 = arith.constant 0 : i32
    %c0_i32_0 = arith.constant 0 : i32
    %c0_i32_1 = arith.constant 0 : i32
    return %c0_i32, %c0_i32_0 : i32, i32
  }
  func.func @transform_2(%arg0: i32) -> (i32, i32) {
    %c0_i32 = arith.constant 0 : i32
    %c0_i32_0 = arith.constant 0 : i32
    %c0_i32_1 = arith.constant 0 : i32
    return %c0_i32, %c0_i32_0 : i32, i32
  }
  func.func @transform_3(%arg0: i32) -> (i32, i32) {
    %c0_i32 = arith.constant 0 : i32
    %c0_i32_0 = arith.constant 0 : i32
    %c0_i32_1 = arith.constant 0 : i32
    return %c0_i32, %c0_i32_0 : i32, i32
  }
  func.func @transform_4(%arg0: i32) -> (i32, i32) {
    %c0_i32 = arith.constant 0 : i32
    %c0_i32_0 = arith.constant 0 : i32
    %c0_i32_1 = arith.constant 0 : i32
    return %c0_i32, %c0_i32_0 : i32, i32
  }
  func.func @transform_5(%arg0: i32) -> (i32, i32) {
    %c0_i32 = arith.constant 0 : i32
    %c0_i32_0 = arith.constant 0 : i32
    %c0_i32_1 = arith.constant 0 : i32
    return %c0_i32, %c0_i32_0 : i32, i32
  }
  func.func @transform_6(%arg0: i32) -> (i32, i32) {
    %c0_i32 = arith.constant 0 : i32
    %c0_i32_0 = arith.constant 0 : i32
    %c0_i32_1 = arith.constant 0 : i32
    return %c0_i32, %c0_i32_0 : i32, i32
  }
  func.func @transform_7(%arg0: i32) -> (i32, i32) {
    %c0_i32 = arith.constant 0 : i32
    %c0_i32_0 = arith.constant 0 : i32
    %c0_i32_1 = arith.constant 0 : i32
    return %c0_i32, %c0_i32_0 : i32, i32
  }
  func.func @transform_8(%arg0: i32) -> (i32, i32) {
    %c0_i32 = arith.constant 0 : i32
    %c0_i32_0 = arith.constant 0 : i32
    %c0_i32_1 = arith.constant 0 : i32
    return %c0_i32, %c0_i32_0 : i32, i32
  }
  func.func @transform_9(%arg0: i32) -> (i32, i32) {
    %c0_i32 = arith.constant 0 : i32
    %c0_i32_0 = arith.constant 0 : i32
    %c0_i32_1 = arith.constant 0 : i32
    return %c0_i32, %c0_i32_0 : i32, i32
  }
  func.func @transform_10(%arg0: i32) -> (i32, i32) {
    %c0_i32 = arith.constant 0 : i32
    %c0_i32_0 = arith.constant 0 : i32
    %c0_i32_1 = arith.constant 0 : i32
    return %c0_i32, %c0_i32_0 : i32, i32
  }
  func.func @transform_11(%arg0: i32) -> (i32, i32) {
    %c0_i32 = arith.constant 0 : i32
    %c0_i32_0 = arith.constant 0 : i32
    %c0_i32_1 = arith.constant 0 : i32
    return %c0_i32, %c0_i32_0 : i32, i32
  }
  func.func @transform_12(%arg0: i32) -> (i32, i32, i32) {
    %c0_i32 = arith.constant 0 : i32
    %c0_i32_0 = arith.constant 0 : i32
    %c0_i32_1 = arith.constant 0 : i32
    return %arg0, %c0_i32, %c0_i32_0 : i32, i32, i32
  }
}

</mosaic_0001>

<llo_original>
// kernel: tpu_custom_call.1
$region0: #{tpu_custom_call.1}
  #allocation0 [shape = 'u32[]', space=smem, size = 0x4, offset = 0x4, fixed_abs, tag = 'smem constant byte address 0x4 - core index']
  #allocation1 [shape = 'u32[144,128]{1,0:T(1,128)}', space=vmem, size = 0x12000, scoped, tag = 'internal scratch']
  #allocation2 [shape = 'f32[1,8,32]{2,1,0:T(8,128)}', space=vmem, size = 0x1000, scoped, tag = 'scratch operand']
  %s0 = inlined_call_operand.vmem [shape: f32[2,8,32], index: 0, kind: input, shape index: {}]
  %s1 = inlined_call_operand.vmem [shape: f32[1,32], index: 1, kind: input, shape index: {}]
  %s2 = inlined_call_operand.vmem [shape: f32[1,32], index: 2, kind: input, shape index: {}]
  %s3 = inlined_call_operand.vmem [shape: f32[32,96], index: 3, kind: input, shape index: {}]
  %s4 = inlined_call_operand.vmem [shape: f32[32,32], index: 4, kind: input, shape index: {}]
  %s5 = inlined_call_operand.vmem [shape: f32[1,32], index: 5, kind: input, shape index: {}]
  %s6 = inlined_call_operand.vmem [shape: f32[1,32], index: 6, kind: input, shape index: {}]
  %s7 = inlined_call_operand.vmem [shape: f32[1,32], index: 7, kind: input, shape index: {}]
  %s8 = inlined_call_operand.vmem [shape: f32[32,128], index: 8, kind: input, shape index: {}]
  %s9 = inlined_call_operand.vmem [shape: f32[1,128], index: 9, kind: input, shape index: {}]
  %s10 = inlined_call_operand.vmem [shape: f32[128,32], index: 10, kind: input, shape index: {}]
  %s11 = inlined_call_operand.vmem [shape: f32[1,32], index: 11, kind: input, shape index: {}]
  %s12 = inlined_call_operand.hbm [shape: f32[2,8,32], index: 12, kind: output, shape index: {}]
  %s13 = sld [smem:[#allocation0]]
  $region81: #{tpu_custom_call.1} parent=0
    _
  %s15 = ssub.s32 1, %s13
  %s16 = scalar_select 0, %s15, %s13
  $region1: #{tpu_custom_call.1} parent=0
    #allocation3 [shape = 'u8[8192]{0}', space=vmem, size = 0x2000, scoped, tag = 'output window, operand 0']
    #allocation4 [shape = 's32[2]{0}', space=sflag, size = 0x8, scoped, tag = 'scoped memory for tpu_custom_call.1']
    %17 = vsyncpa [#allocation4], 0
    %s18 = scalar_lea.sflag [#allocation4], 1
    %19 = vsyncpa %s18, 0
    loop: start=0, step=1, limit=4
    $region2: #{tpu_custom_call.1} parent=1 // loop_pre_header
      _
    $region3: #{tpu_custom_call.1} parent=1 // loop_header
      %s21 = sphi 0, %s25
      %p22 = scmp.ge.s32.totalorder %s21, 4
      %s31 = sphi 0, %s33
      %s34 = sphi 0, %s31
      %s35 = sphi 0, %s34
      %s51 = sphi 0, %s35
      %s55 = sphi 0, %s55
      %s57 = sphi 0, %s55
      %s58 = sphi 0, %s57
      %s72 = sphi 0, %s58
      %s76 = sphi 0, %s76
      %s78 = sphi 0, %s76
      %s79 = sphi 0, %s78
      %s93 = sphi 0, %s79
      %s97 = sphi 0, %s97
      %s99 = sphi 0, %s97
      %s100 = sphi 0, %s99
      %s114 = sphi 0, %s100
      %s118 = sphi 0, %s118
      %s120 = sphi 0, %s118
      %s121 = sphi 0, %s120
      %s135 = sphi 0, %s121
      %s139 = sphi 0, %s139
      %s141 = sphi 0, %s139
      %s142 = sphi 0, %s141
      %s156 = sphi 0, %s142
      %s160 = sphi 0, %s160
      %s162 = sphi 0, %s160
      %s163 = sphi 0, %s162
      %s177 = sphi 0, %s163
      %s181 = sphi 0, %s181
      %s183 = sphi 0, %s181
      %s184 = sphi 0, %s183
      %s198 = sphi 0, %s184
      %s202 = sphi 0, %s202
      %s204 = sphi 0, %s202
      %s205 = sphi 0, %s204
      %s219 = sphi 0, %s205
      %s223 = sphi 0, %s223
      %s225 = sphi 0, %s223
      %s226 = sphi 0, %s225
      %s240 = sphi 0, %s226
      %s244 = sphi 0, %s244
      %s246 = sphi 0, %s244
      %s247 = sphi 0, %s246
      %s261 = sphi 0, %s247
      %s265 = sphi 0, %s265
      %s267 = sphi 0, %s265
      %s268 = sphi 0, %s267
      %s282 = sphi 0, %s268
      %s288 = sphi 0, %s290
      %s291 = sphi 0, %s288
      %s292 = sphi 0, %s291
      %s308 = sphi 0, %s292
    $region4: #{tpu_custom_call.1} parent=1 // loop_header_branch
      %24 = sbr.rel (%p22) target = $region8
    $region5: #{tpu_custom_call.1} parent=1 // loop_body
      %s26 = ssub.s32 %s21, 1
      %s27 = ssub.s32 %s21, 2
      %s28 = sadd.s32 %s21, 1
      %s29 = ssub.s32 %s21, %s28
      %p30 = scmp.eq.s32.totalorder %s29, 0
      %s32 = sadd.s32 %s31, 1
      %s33 = scalar_select %p30, %s31, %s32
      %p36 = pneg %p30
      %p37 = scmp.eq.s32.totalorder %s21, 1
      %p38 = por %p36, %p37
      %p39 = scmp.ne.s32.totalorder %s31, %s34
      %p40 = scmp.eq.s32.totalorder %s21, 0
      %p41 = por %p39, %p40
      %p42 = scmp.ne.s32.totalorder %s31, %s34
      %p43 = scmp.eq.s32.totalorder %s26, 1
      %p44 = por %p42, %p43
      %p45 = scmp.ne.s32.totalorder %s34, %s35
      %p46 = scmp.eq.s32.totalorder %s26, 0
      %p47 = por %p45, %p46
      %p48 = scmp.ne.s32.totalorder %s34, %s35
      %p49 = scmp.eq.s32.totalorder %s27, 1
      %p50 = por %p48, %p49
      %p52 = scmp.ne.s32.totalorder %s35, %s51
      %p53 = scmp.eq.s32.totalorder %s27, 0
      %p54 = por %p52, %p53
      %s56 = sadd.s32 %s55, 1
      %p59 = scmp.eq.s32.totalorder %s21, 1
      %p60 = scmp.ne.s32.totalorder %s55, %s57
      %p61 = scmp.eq.s32.totalorder %s21, 0
      %p62 = por %p60, %p61
      %p63 = scmp.ne.s32.totalorder %s55, %s57
      %p64 = scmp.eq.s32.totalorder %s26, 1
      %p65 = por %p63, %p64
      %p66 = scmp.ne.s32.totalorder %s57, %s58
      %p67 = scmp.eq.s32.totalorder %s26, 0
      %p68 = por %p66, %p67
      %p69 = scmp.ne.s32.totalorder %s57, %s58
      %p70 = scmp.eq.s32.totalorder %s27, 1
      %p71 = por %p69, %p70
      %p73 = scmp.ne.s32.totalorder %s58, %s72
      %p74 = scmp.eq.s32.totalorder %s27, 0
      %p75 = por %p73, %p74
      %s77 = sadd.s32 %s76, 1
      %p80 = scmp.eq.s32.totalorder %s21, 1
      %p81 = scmp.ne.s32.totalorder %s76, %s78
      %p82 = scmp.eq.s32.totalorder %s21, 0
      %p83 = por %p81, %p82
      %p84 = scmp.ne.s32.totalorder %s76, %s78
      %p85 = scmp.eq.s32.totalorder %s26, 1
      %p86 = por %p84, %p85
      %p87 = scmp.ne.s32.totalorder %s78, %s79
      %p88 = scmp.eq.s32.totalorder %s26, 0
      %p89 = por %p87, %p88
      %p90 = scmp.ne.s32.totalorder %s78, %s79
      %p91 = scmp.eq.s32.totalorder %s27, 1
      %p92 = por %p90, %p91
      %p94 = scmp.ne.s32.totalorder %s79, %s93
      %p95 = scmp.eq.s32.totalorder %s27, 0
      %p96 = por %p94, %p95
      %s98 = sadd.s32 %s97, 1
      %p101 = scmp.eq.s32.totalorder %s21, 1
      %p102 = scmp.ne.s32.totalorder %s97, %s99
      %p103 = scmp.eq.s32.totalorder %s21, 0
      %p104 = por %p102, %p103
      %p105 = scmp.ne.s32.totalorder %s97, %s99
      %p106 = scmp.eq.s32.totalorder %s26, 1
      %p107 = por %p105, %p106
      %p108 = scmp.ne.s32.totalorder %s99, %s100
      %p109 = scmp.eq.s32.totalorder %s26, 0
      %p110 = por %p108, %p109
      %p111 = scmp.ne.s32.totalorder %s99, %s100
      %p112 = scmp.eq.s32.totalorder %s27, 1
      %p113 = por %p111, %p112
      %p115 = scmp.ne.s32.totalorder %s100, %s114
      %p116 = scmp.eq.s32.totalorder %s27, 0
      %p117 = por %p115, %p116
      %s119 = sadd.s32 %s118, 1
      %p122 = scmp.eq.s32.totalorder %s21, 1
      %p123 = scmp.ne.s32.totalorder %s118, %s120
      %p124 = scmp.eq.s32.totalorder %s21, 0
      %p125 = por %p123, %p124
      %p126 = scmp.ne.s32.totalorder %s118, %s120
      %p127 = scmp.eq.s32.totalorder %s26, 1
      %p128 = por %p126, %p127
      %p129 = scmp.ne.s32.totalorder %s120, %s121
      %p130 = scmp.eq.s32.totalorder %s26, 0
      %p131 = por %p129, %p130
      %p132 = scmp.ne.s32.totalorder %s120, %s121
      %p133 = scmp.eq.s32.totalorder %s27, 1
      %p134 = por %p132, %p133
      %p136 = scmp.ne.s32.totalorder %s121, %s135
      %p137 = scmp.eq.s32.totalorder %s27, 0
      %p138 = por %p136, %p137
      %s140 = sadd.s32 %s139, 1
      %p143 = scmp.eq.s32.totalorder %s21, 1
      %p144 = scmp.ne.s32.totalorder %s139, %s141
      %p145 = scmp.eq.s32.totalorder %s21, 0
      %p146 = por %p144, %p145
      %p147 = scmp.ne.s32.totalorder %s139, %s141
      %p148 = scmp.eq.s32.totalorder %s26, 1
      %p149 = por %p147, %p148
      %p150 = scmp.ne.s32.totalorder %s141, %s142
      %p151 = scmp.eq.s32.totalorder %s26, 0
      %p152 = por %p150, %p151
      %p153 = scmp.ne.s32.totalorder %s141, %s142
      %p154 = scmp.eq.s32.totalorder %s27, 1
      %p155 = por %p153, %p154
      %p157 = scmp.ne.s32.totalorder %s142, %s156
      %p158 = scmp.eq.s32.totalorder %s27, 0
      %p159 = por %p157, %p158
      %s161 = sadd.s32 %s160, 1
      %p164 = scmp.eq.s32.totalorder %s21, 1
      %p165 = scmp.ne.s32.totalorder %s160, %s162
      %p166 = scmp.eq.s32.totalorder %s21, 0
      %p167 = por %p165, %p166
      %p168 = scmp.ne.s32.totalorder %s160, %s162
      %p169 = scmp.eq.s32.totalorder %s26, 1
      %p170 = por %p168, %p169
      %p171 = scmp.ne.s32.totalorder %s162, %s163
      %p172 = scmp.eq.s32.totalorder %s26, 0
      %p173 = por %p171, %p172
      %p174 = scmp.ne.s32.totalorder %s162, %s163
      %p175 = scmp.eq.s32.totalorder %s27, 1
      %p176 = por %p174, %p175
      %p178 = scmp.ne.s32.totalorder %s163, %s177
      %p179 = scmp.eq.s32.totalorder %s27, 0
      %p180 = por %p178, %p179
      %s182 = sadd.s32 %s181, 1
      %p185 = scmp.eq.s32.totalorder %s21, 1
      %p186 = scmp.ne.s32.totalorder %s181, %s183
      %p187 = scmp.eq.s32.totalorder %s21, 0
      %p188 = por %p186, %p187
      %p189 = scmp.ne.s32.totalorder %s181, %s183
      %p190 = scmp.eq.s32.totalorder %s26, 1
      %p191 = por %p189, %p190
      %p192 = scmp.ne.s32.totalorder %s183, %s184
      %p193 = scmp.eq.s32.totalorder %s26, 0
      %p194 = por %p192, %p193
      %p195 = scmp.ne.s32.totalorder %s183, %s184
      %p196 = scmp.eq.s32.totalorder %s27, 1
      %p197 = por %p195, %p196
      %p199 = scmp.ne.s32.totalorder %s184, %s198
      %p200 = scmp.eq.s32.totalorder %s27, 0
      %p201 = por %p199, %p200
      %s203 = sadd.s32 %s202, 1
      %p206 = scmp.eq.s32.totalorder %s21, 1
      %p207 = scmp.ne.s32.totalorder %s202, %s204
      %p208 = scmp.eq.s32.totalorder %s21, 0
      %p209 = por %p207, %p208
      %p210 = scmp.ne.s32.totalorder %s202, %s204
      %p211 = scmp.eq.s32.totalorder %s26, 1
      %p212 = por %p210, %p211
      %p213 = scmp.ne.s32.totalorder %s204, %s205
      %p214 = scmp.eq.s32.totalorder %s26, 0
      %p215 = por %p213, %p214
      %p216 = scmp.ne.s32.totalorder %s204, %s205
      %p217 = scmp.eq.s32.totalorder %s27, 1
      %p218 = por %p216, %p217
      %p220 = scmp.ne.s32.totalorder %s205, %s219
      %p221 = scmp.eq.s32.totalorder %s27, 0
      %p222 = por %p220, %p221
      %s224 = sadd.s32 %s223, 1
      %p227 = scmp.eq.s32.totalorder %s21, 1
      %p228 = scmp.ne.s32.totalorder %s223, %s225
      %p229 = scmp.eq.s32.totalorder %s21, 0
      %p230 = por %p228, %p229
      %p231 = scmp.ne.s32.totalorder %s223, %s225
      %p232 = scmp.eq.s32.totalorder %s26, 1
      %p233 = por %p231, %p232
      %p234 = scmp.ne.s32.totalorder %s225, %s226
      %p235 = scmp.eq.s32.totalorder %s26, 0
      %p236 = por %p234, %p235
      %p237 = scmp.ne.s32.totalorder %s225, %s226
      %p238 = scmp.eq.s32.totalorder %s27, 1
      %p239 = por %p237, %p238
      %p241 = scmp.ne.s32.totalorder %s226, %s240
      %p242 = scmp.eq.s32.totalorder %s27, 0
      %p243 = por %p241, %p242
      %s245 = sadd.s32 %s244, 1
      %p248 = scmp.eq.s32.totalorder %s21, 1
      %p249 = scmp.ne.s32.totalorder %s244, %s246
      %p250 = scmp.eq.s32.totalorder %s21, 0
      %p251 = por %p249, %p250
      %p252 = scmp.ne.s32.totalorder %s244, %s246
      %p253 = scmp.eq.s32.totalorder %s26, 1
      %p254 = por %p252, %p253
      %p255 = scmp.ne.s32.totalorder %s246, %s247
      %p256 = scmp.eq.s32.totalorder %s26, 0
      %p257 = por %p255, %p256
      %p258 = scmp.ne.s32.totalorder %s246, %s247
      %p259 = scmp.eq.s32.totalorder %s27, 1
      %p260 = por %p258, %p259
      %p262 = scmp.ne.s32.totalorder %s247, %s261
      %p263 = scmp.eq.s32.totalorder %s27, 0
      %p264 = por %p262, %p263
      %s266 = sadd.s32 %s265, 1
      %p269 = scmp.eq.s32.totalorder %s21, 1
      %p270 = scmp.ne.s32.totalorder %s265, %s267
      %p271 = scmp.eq.s32.totalorder %s21, 0
      %p272 = por %p270, %p271
      %p273 = scmp.ne.s32.totalorder %s265, %s267
      %p274 = scmp.eq.s32.totalorder %s26, 1
      %p275 = por %p273, %p274
      %p276 = scmp.ne.s32.totalorder %s267, %s268
      %p277 = scmp.eq.s32.totalorder %s26, 0
      %p278 = por %p276, %p277
      %p279 = scmp.ne.s32.totalorder %s267, %s268
      %p280 = scmp.eq.s32.totalorder %s27, 1
      %p281 = por %p279, %p280
      %p283 = scmp.ne.s32.totalorder %s268, %s282
      %p284 = scmp.eq.s32.totalorder %s27, 0
      %p285 = por %p283, %p284
      %s286 = ssub.s32 %s21, %s28
      %p287 = scmp.eq.s32.totalorder %s286, 0
      %s289 = sadd.s32 %s288, 1
      %s290 = scalar_select %p287, %s288, %s289
      %p293 = pneg %p287
      %p294 = scmp.eq.s32.totalorder %s21, 1
      %p295 = por %p293, %p294
      %p296 = scmp.ne.s32.totalorder %s288, %s291
      %p297 = scmp.eq.s32.totalorder %s21, 0
      %p298 = por %p296, %p297
      %p299 = scmp.ne.s32.totalorder %s288, %s291
      %p300 = scmp.eq.s32.totalorder %s26, 1
      %p301 = por %p299, %p300
      %p302 = scmp.ne.s32.totalorder %s291, %s292
      %p303 = scmp.eq.s32.totalorder %s26, 0
      %p304 = por %p302, %p303
      %p305 = scmp.ne.s32.totalorder %s291, %s292
      %p306 = scmp.eq.s32.totalorder %s27, 1
      %p307 = por %p305, %p306
      %p309 = scmp.ne.s32.totalorder %s292, %s308
      %p310 = scmp.eq.s32.totalorder %s27, 0
      %p311 = por %p309, %p310
      %p312 = scmp.le.s32.totalorder 1, %s21
      %p313 = scmp.lt.s32.totalorder %s21, 3
      %p314 = pnand %p312, %p313
      %p315 = pneg %p314
      // Predicated region
      $region9: #{tpu_custom_call.1} parent=5 // pred_check
        _
      $region10: #{tpu_custom_call.1} parent=5 // pred_check_branch
        %317 = sbr.rel (%p314) target = $region12
      $region11: #{tpu_custom_call.1} parent=5 // pred_region
        %s318 = ssub.s32 %s21, 1
        // Predicated region
        $region13: #{tpu_custom_call.1} parent=11 // pred_check
          %p319 = pneg %p68
        $region14: #{tpu_custom_call.1} parent=11 // pred_check_branch
          %321 = sbr.rel (%p319) target = $region16
        $region15: #{tpu_custom_call.1} parent=11 // pred_region
          _
        $region16: #{tpu_custom_call.1} parent=11 // pred_fallthru
          _
        // Predicated region
        $region17: #{tpu_custom_call.1} parent=11 // pred_check
          %p322 = pneg %p89
        $region18: #{tpu_custom_call.1} parent=11 // pred_check_branch
          %324 = sbr.rel (%p322) target = $region20
        $region19: #{tpu_custom_call.1} parent=11 // pred_region
          _
        $region20: #{tpu_custom_call.1} parent=11 // pred_fallthru
          _
        // Predicated region
        $region21: #{tpu_custom_call.1} parent=11 // pred_check
          %p325 = pneg %p110
        $region22: #{tpu_custom_call.1} parent=11 // pred_check_branch
          %327 = sbr.rel (%p325) target = $region24
        $region23: #{tpu_custom_call.1} parent=11 // pred_region
          _
        $region24: #{tpu_custom_call.1} parent=11 // pred_fallthru
          _
        // Predicated region
        $region25: #{tpu_custom_call.1} parent=11 // pred_check
          %p328 = pneg %p131
        $region26: #{tpu_custom_call.1} parent=11 // pred_check_branch
          %330 = sbr.rel (%p328) target = $region28
        $region27: #{tpu_custom_call.1} parent=11 // pred_region
          _
        $region28: #{tpu_custom_call.1} parent=11 // pred_fallthru
          _
        // Predicated region
        $region29: #{tpu_custom_call.1} parent=11 // pred_check
          %p331 = pneg %p152
        $region30: #{tpu_custom_call.1} parent=11 // pred_check_branch
          %333 = sbr.rel (%p331) target = $region32
        $region31: #{tpu_custom_call.1} parent=11 // pred_region
          _
        $region32: #{tpu_custom_call.1} parent=11 // pred_fallthru
          _
        // Predicated region
        $region33: #{tpu_custom_call.1} parent=11 // pred_check
          %p334 = pneg %p173
        $region34: #{tpu_custom_call.1} parent=11 // pred_check_branch
          %336 = sbr.rel (%p334) target = $region36
        $region35: #{tpu_custom_call.1} parent=11 // pred_region
          _
        $region36: #{tpu_custom_call.1} parent=11 // pred_fallthru
          _
        // Predicated region
        $region37: #{tpu_custom_call.1} parent=11 // pred_check
          %p337 = pneg %p194
        $region38: #{tpu_custom_call.1} parent=11 // pred_check_branch
          %339 = sbr.rel (%p337) target = $region40
        $region39: #{tpu_custom_call.1} parent=11 // pred_region
          _
        $region40: #{tpu_custom_call.1} parent=11 // pred_fallthru
          _
        // Predicated region
        $region41: #{tpu_custom_call.1} parent=11 // pred_check
          %p340 = pneg %p215
        $region42: #{tpu_custom_call.1} parent=11 // pred_check_branch
          %342 = sbr.rel (%p340) target = $region44
        $region43: #{tpu_custom_call.1} parent=11 // pred_region
          _
        $region44: #{tpu_custom_call.1} parent=11 // pred_fallthru
          _
        // Predicated region
        $region45: #{tpu_custom_call.1} parent=11 // pred_check
          %p343 = pneg %p236
        $region46: #{tpu_custom_call.1} parent=11 // pred_check_branch
          %345 = sbr.rel (%p343) target = $region48
        $region47: #{tpu_custom_call.1} parent=11 // pred_region
          _
        $region48: #{tpu_custom_call.1} parent=11 // pred_fallthru
          _
        // Predicated region
        $region49: #{tpu_custom_call.1} parent=11 // pred_check
          %p346 = pneg %p257
        $region50: #{tpu_custom_call.1} parent=11 // pred_check_branch
          %348 = sbr.rel (%p346) target = $region52
        $region51: #{tpu_custom_call.1} parent=11 // pred_region
          _
        $region52: #{tpu_custom_call.1} parent=11 // pred_fallthru
          _
        // Predicated region
        $region53: #{tpu_custom_call.1} parent=11 // pred_check
          %p349 = pneg %p278
        $region54: #{tpu_custom_call.1} parent=11 // pred_check_branch
          %351 = sbr.rel (%p349) target = $region56
        $region55: #{tpu_custom_call.1} parent=11 // pred_region
          _
        $region56: #{tpu_custom_call.1} parent=11 // pred_fallthru
          _
      $region12: #{tpu_custom_call.1} parent=5 // pred_fallthru
        _
      %p352 = scmp.lt.s32.totalorder %s21, 2
      // Predicated region
      $region57: #{tpu_custom_call.1} parent=5 // pred_check
        %p353 = pneg %p352
      $region58: #{tpu_custom_call.1} parent=5 // pred_check_branch
        %355 = sbr.rel (%p353) target = $region60
      $region59: #{tpu_custom_call.1} parent=5 // pred_region
        // Predicated region
        $region61: #{tpu_custom_call.1} parent=59 // pred_check
          %p356 = pneg %p41
        $region62: #{tpu_custom_call.1} parent=59 // pred_check_branch
          %358 = sbr.rel (%p356) target = $region64
        $region63: #{tpu_custom_call.1} parent=59 // pred_region
          %p359 = scmp.lt.s32.totalorder %s21, 1
          %s360 = scalar_select %p359, %s21, 1
          %s361 = smul.addr %s360, 8
          %s362 = scalar_lea.vmem %s0, %s361
        $region64: #{tpu_custom_call.1} parent=59 // pred_fallthru
          _
      $region60: #{tpu_custom_call.1} parent=5 // pred_fallthru
        _
      %p363 = scmp.le.s32.totalorder 1, %s21
      %p364 = scmp.lt.s32.totalorder %s21, 3
      %p365 = pnand %p363, %p364
      %p366 = pneg %p365
      // Predicated region
      $region65: #{tpu_custom_call.1} parent=5 // pred_check
        _
      $region66: #{tpu_custom_call.1} parent=5 // pred_check_branch
        %368 = sbr.rel (%p365) target = $region68
      $region67: #{tpu_custom_call.1} parent=5 // pred_region
        %s369 = ssub.s32 %s21, 1
        %p370 = scmp.lt.s32.totalorder %s26, 1
        %s371 = scalar_select %p370, %s26, 1
        %s372 = smul.addr %s371, 8
        %s373 = scalar_lea.vmem %s0, %s372
        %p374 = pneg %p47
        %p375 = pneg %p44
        %p376 = pneg %p68
        %p377 = pneg %p65
        %p378 = pneg %p89
        %p379 = pneg %p86
        %p380 = pneg %p110
        %p381 = pneg %p107
        %p382 = pneg %p131
        %p383 = pneg %p128
        %p384 = pneg %p152
        %p385 = pneg %p149
        %p386 = pneg %p173
        %p387 = pneg %p170
        %p388 = pneg %p194
        %p389 = pneg %p191
        %p390 = pneg %p215
        %p391 = pneg %p212
        %p392 = pneg %p236
        %p393 = pneg %p233
        %p394 = pneg %p257
        %p395 = pneg %p254
        %p396 = pneg %p278
        %p397 = pneg %p275
        %p398 = pneg %p304
        %p399 = pneg %p301
        %s400 = sand.u32 %s291, 1
        %s401 = scalar_lea.sflag [#allocation4], %s400
        %s402 = sand.u32 %s291, 1
        %s403 = smul.addr %s402, 8
        %s404 = scalar_lea.vmem [#allocation3], %s403
        %p405 = scmp.lt.s32.totalorder %s26, 1
        %s406 = scalar_select %p405, %s26, 1
        %s407 = smul.addr %s406, 8
        %s408 = scalar_lea.vmem %s0, %s407
        %v409 = vld [vmem:[%s408] sm:$0xff]
        %v410 = vld [vmem:[%s1] sm:$0x1]
        %v411 = vld [vmem:[%s2] sm:$0x1]
        %vm412 = vcmask 261120
        %v413 = vsel %vm412, %v409, 0.0
        %414 = vadd.xlane.f32.xlu0 %v413
        %v415 = vpop.xlane.xlu0 %414
        %v416 = vrcp.pop 32.0
        %v417 = vmul.f32 %v415, %v416
        %v418 = vsub.f32 %v409, %v417
        %v419 = vmul.f32 %v418, %v418
        %v420 = vsel %vm412, %v419, 0.0
        %421 = vadd.xlane.f32.xlu0 %v420
        %v422 = vpop.xlane.xlu0 %421
        %v423 = vmul.f32 %v422, %v416
        %v424 = vadd.f32 %v423, 1e-05
        %v425 = vrsqrt.pop %v424
        %v426 = vmul.f32 %v418, %v425
        %v428 = vlaneseq
        %v429 = vshrl.u32 %v428, 7
        %v430 = vsub.s32 0, %v429
        %v431 = vrot.slane %v410, %v430
        %v433 = vmul.f32 %v426, %v431
        %v435 = vlaneseq
        %v436 = vshrl.u32 %v435, 7
        %v437 = vsub.s32 0, %v436
        %v438 = vrot.slane %v411, %v437
        %v440 = vadd.f32 %v433, %v438
        %v441 = vld [vmem:[%s3] sm:$0xff]
        %v442 = vld [vmem:[%s3 + $0x8] sm:$0xff]
        %v443 = vld [vmem:[%s3 + $0x10] sm:$0xff]
        %v444 = vld [vmem:[%s3 + $0x18] sm:$0xff]
        %v446 = vsel %vm412, %v440, 0
        %448 = vmatprep.subr.mxu0 0.0
        %449 = vmatpush1.msra.mxu0 %v441
        %450 = vmatprep.subr.mxu0 0.0
        %451 = vmatpush1.msra.mxu0 %v442
        %452 = vmatprep.subr.mxu0 0.0
        %453 = vmatpush1.msra.mxu0 %v443
        %454 = vmatprep.subr.mxu0 0.0
        %455 = vmatpush1.msra.mxu0 %v444
        %456 = vmatprep.subr.mxu0 0.0
        %457 = vmatpush1.msra.mxu0 0.0
        %458 = vmatprep.subr.mxu0 0.0
        %459 = vmatpush1.msra.mxu0 0.0
        %460 = vmatprep.subr.mxu0 0.0
        %461 = vmatpush1.msra.mxu0 0.0
        %462 = vmatprep.subr.mxu0 0.0
        %463 = vmatpush1.msra.mxu0 0.0
        %464 = vmatprep.subr.mxu0 0.0
        %465 = vmatpush1.msra.mxu0 0.0
        %466 = vmatprep.subr.mxu0 0.0
        %467 = vmatpush1.msra.mxu0 0.0
        %468 = vmatprep.subr.mxu0 0.0
        %469 = vmatpush1.msra.mxu0 0.0
        %470 = vmatprep.subr.mxu0 0.0
        %471 = vmatpush1.msra.mxu0 0.0
        %472 = vmatprep.subr.mxu0 0.0
        %473 = vmatpush1.msra.mxu0 0.0
        %474 = vmatprep.subr.mxu0 0.0
        %475 = vmatpush1.msra.mxu0 0.0
        %476 = vmatprep.subr.mxu0 0.0
        %477 = vmatpush1.msra.mxu0 0.0
        %478 = vmatprep.subr.mxu0 0.0
        %479 = vmatpush1.msra.mxu0 0.0
        %480 = vmatprep.subr.mxu0 0.0
        %481 = vmatpush1.msra.mxu0 0.0
        %482 = vmatprep.subr.mxu0 0.0
        %483 = vmatpush1.msra.mxu0 0.0
        %484 = vmatprep.subr.mxu0 0.0
        %485 = vmatpush1.msra.mxu0 0.0
        %486 = vmatprep.subr.mxu0 0.0
        %487 = vmatpush1.msra.mxu0 0.0
        %488 = vmatprep.subr.mxu0 0.0
        %489 = vmatpush1.msra.mxu0 0.0
        %490 = vmatprep.subr.mxu0 0.0
        %491 = vmatpush1.msra.mxu0 0.0
        %492 = vmatprep.subr.mxu0 0.0
        %493 = vmatpush1.msra.mxu0 0.0
        %494 = vmatprep.subr.mxu0 0.0
        %495 = vmatpush1.msra.mxu0 0.0
        %496 = vmatprep.subr.mxu0 0.0
        %497 = vmatpush1.msra.mxu0 0.0
        %498 = vmatprep.subr.mxu0 0.0
        %499 = vmatpush1.msra.mxu0 0.0
        %500 = vmatprep.subr.mxu0 0.0
        %501 = vmatpush1.msra.mxu0 0.0
        %502 = vmatprep.subr.mxu0 0.0
        %503 = vmatpush1.msra.mxu0 0.0
        %504 = vmatprep.subr.mxu0 0.0
        %505 = vmatpush1.msra.mxu0 0.0
        %506 = vmatprep.subr.mxu0 0.0
        %507 = vmatpush1.msra.mxu0 0.0
        %508 = vmatprep.subr.mxu0 0.0
        %509 = vmatpush1.msra.mxu0 0.0
        %510 = vmatprep.subr.mxu0 0.0
        %511 = vmatpush1.msra.mxu0 0.0
        %512 = vmatprep.mubr.f32.mxu0 0.0
        %513 = vmatmul.mubr.f32.gmra.mrb[0].mxu0 %v446
        %v514 = vpop.f32.mrb[0].mxu0
        %v515 = vadd.f32 0.0, %v514
        %v516 = vpop.f32.mrb[0].mxu0
        %517 = vdwg.mxu0
        %519 = vrot.lane.b32.xlu0 %v515, 96
        %v520 = vpop.permute.xlu0 %519
        %vm521 = vcmask 64512
        %v522 = vsel %vm521, %v515, 0
        %v524 = vsel %vm521, %v520, 0
        %526 = vmatprep.subr.mxu0 0.0
        %527 = vmatpush1.xpose.msra.mxu0 %v524
        %528 = vmatprep.subr.mxu0 0.0
        %529 = vmatpush1.xpose.msra.mxu0 0.0
        %530 = vmatprep.subr.mxu0 0.0
        %531 = vmatpush1.xpose.msra.mxu0 0.0
        %532 = vmatprep.subr.mxu0 0.0
        %533 = vmatpush1.xpose.msra.mxu0 0.0
        %534 = vmatprep.subr.mxu0 0.0
        %535 = vmatpush1.xpose.msra.mxu0 0.0
        %536 = vmatprep.subr.mxu0 0.0
        %537 = vmatpush1.xpose.msra.mxu0 0.0
        %538 = vmatprep.subr.mxu0 0.0
        %539 = vmatpush1.xpose.msra.mxu0 0.0
        %540 = vmatprep.subr.mxu0 0.0
        %541 = vmatpush1.xpose.msra.mxu0 0.0
        %542 = vmatprep.subr.mxu0 0.0
        %543 = vmatpush1.xpose.msra.mxu0 0.0
        %544 = vmatprep.subr.mxu0 0.0
        %545 = vmatpush1.xpose.msra.mxu0 0.0
        %546 = vmatprep.subr.mxu0 0.0
        %547 = vmatpush1.xpose.msra.mxu0 0.0
        %548 = vmatprep.subr.mxu0 0.0
        %549 = vmatpush1.xpose.msra.mxu0 0.0
        %550 = vmatprep.subr.mxu0 0.0
        %551 = vmatpush1.xpose.msra.mxu0 0.0
        %552 = vmatprep.subr.mxu0 0.0
        %553 = vmatpush1.xpose.msra.mxu0 0.0
        %554 = vmatprep.subr.mxu0 0.0
        %555 = vmatpush1.xpose.msra.mxu0 0.0
        %556 = vmatprep.subr.mxu0 0.0
        %557 = vmatpush1.xpose.msra.mxu0 0.0
        %558 = vmatprep.subr.mxu0 0.0
        %559 = vmatpush1.xpose.msra.mxu0 0.0
        %560 = vmatprep.subr.mxu0 0.0
        %561 = vmatpush1.xpose.msra.mxu0 0.0
        %562 = vmatprep.subr.mxu0 0.0
        %563 = vmatpush1.xpose.msra.mxu0 0.0
        %564 = vmatprep.subr.mxu0 0.0
        %565 = vmatpush1.xpose.msra.mxu0 0.0
        %566 = vmatprep.subr.mxu0 0.0
        %567 = vmatpush1.xpose.msra.mxu0 0.0
        %568 = vmatprep.subr.mxu0 0.0
        %569 = vmatpush1.xpose.msra.mxu0 0.0
        %570 = vmatprep.subr.mxu0 0.0
        %571 = vmatpush1.xpose.msra.mxu0 0.0
        %572 = vmatprep.subr.mxu0 0.0
        %573 = vmatpush1.xpose.msra.mxu0 0.0
        %574 = vmatprep.subr.mxu0 0.0
        %575 = vmatpush1.xpose.msra.mxu0 0.0
        %576 = vmatprep.subr.mxu0 0.0
        %577 = vmatpush1.xpose.msra.mxu0 0.0
        %578 = vmatprep.subr.mxu0 0.0
        %579 = vmatpush1.xpose.msra.mxu0 0.0
        %580 = vmatprep.subr.mxu0 0.0
        %581 = vmatpush1.xpose.msra.mxu0 0.0
        %582 = vmatprep.subr.mxu0 0.0
        %583 = vmatpush1.xpose.msra.mxu0 0.0
        %584 = vmatprep.subr.mxu0 0.0
        %585 = vmatpush1.xpose.msra.mxu0 0.0
        %586 = vmatprep.subr.mxu0 0.0
        %587 = vmatpush1.xpose.msra.mxu0 0.0
        %588 = vmatprep.subr.mxu0 0.0
        %589 = vmatpush1.xpose.msra.mxu0 0.0
        %590 = vmatprep.mubr.f32.mxu0 0.0
        %591 = vmatmul.mubr.f32.gmra.mrb[0].mxu0 %v522
        %v592 = vpop.f32.mrb[0].mxu0
        %v593 = vadd.f32 0.0, %v592
        %v594 = vpop.f32.mrb[0].mxu0
        %595 = vdwg.mxu0
        %v596 = vsel %vm521, %v593, -inf
        %597 = vmax.xlane.f32.xlu0 %v596
        %v598 = vpop.xlane.xlu0 %597
        %v599 = vsub.f32 %v593, %v598
        %v600 = vmul.f32 %v599, 1.442695
        %v601 = vpow.pop %v600
        %v602 = vsel %vm521, %v601, 0.0
        %603 = vadd.xlane.f32.xlu0 %v602
        %v604 = vpop.xlane.xlu0 %603
        %v605 = vrcp.pop %v604
        %v606 = vmul.f32 %v601, %v605
        %607 = vrot.lane.b32.xlu0 %v515, 64
        %v608 = vpop.permute.xlu0 %607
        %v611 = vsel %vm521, %v606, 0
        %613 = vmatprep.subr.mxu0 0.0
        %614 = vmatpush1.msra.mxu0 %v608
        %615 = vmatprep.subr.mxu0 0.0
        %616 = vmatpush1.msra.mxu0 0.0
        %617 = vmatprep.subr.mxu0 0.0
        %618 = vmatpush1.msra.mxu0 0.0
        %619 = vmatprep.subr.mxu0 0.0
        %620 = vmatpush1.msra.mxu0 0.0
        %621 = vmatprep.subr.mxu0 0.0
        %622 = vmatpush1.msra.mxu0 0.0
        %623 = vmatprep.subr.mxu0 0.0
        %624 = vmatpush1.msra.mxu0 0.0
        %625 = vmatprep.subr.mxu0 0.0
        %626 = vmatpush1.msra.mxu0 0.0
        %627 = vmatprep.subr.mxu0 0.0
        %628 = vmatpush1.msra.mxu0 0.0
        %629 = vmatprep.subr.mxu0 0.0
        %630 = vmatpush1.msra.mxu0 0.0
        %631 = vmatprep.subr.mxu0 0.0
        %632 = vmatpush1.msra.mxu0 0.0
        %633 = vmatprep.subr.mxu0 0.0
        %634 = vmatpush1.msra.mxu0 0.0
        %635 = vmatprep.subr.mxu0 0.0
        %636 = vmatpush1.msra.mxu0 0.0
        %637 = vmatprep.subr.mxu0 0.0
        %638 = vmatpush1.msra.mxu0 0.0
        %639 = vmatprep.subr.mxu0 0.0
        %640 = vmatpush1.msra.mxu0 0.0
        %641 = vmatprep.subr.mxu0 0.0
        %642 = vmatpush1.msra.mxu0 0.0
        %643 = vmatprep.subr.mxu0 0.0
        %644 = vmatpush1.msra.mxu0 0.0
        %645 = vmatprep.subr.mxu0 0.0
        %646 = vmatpush1.msra.mxu0 0.0
        %647 = vmatprep.subr.mxu0 0.0
        %648 = vmatpush1.msra.mxu0 0.0
        %649 = vmatprep.subr.mxu0 0.0
        %650 = vmatpush1.msra.mxu0 0.0
        %651 = vmatprep.subr.mxu0 0.0
        %652 = vmatpush1.msra.mxu0 0.0
        %653 = vmatprep.subr.mxu0 0.0
        %654 = vmatpush1.msra.mxu0 0.0
        %655 = vmatprep.subr.mxu0 0.0
        %656 = vmatpush1.msra.mxu0 0.0
        %657 = vmatprep.subr.mxu0 0.0
        %658 = vmatpush1.msra.mxu0 0.0
        %659 = vmatprep.subr.mxu0 0.0
        %660 = vmatpush1.msra.mxu0 0.0
        %661 = vmatprep.subr.mxu0 0.0
        %662 = vmatpush1.msra.mxu0 0.0
        %663 = vmatprep.subr.mxu0 0.0
        %664 = vmatpush1.msra.mxu0 0.0
        %665 = vmatprep.subr.mxu0 0.0
        %666 = vmatpush1.msra.mxu0 0.0
        %667 = vmatprep.subr.mxu0 0.0
        %668 = vmatpush1.msra.mxu0 0.0
        %669 = vmatprep.subr.mxu0 0.0
        %670 = vmatpush1.msra.mxu0 0.0
        %671 = vmatprep.subr.mxu0 0.0
        %672 = vmatpush1.msra.mxu0 0.0
        %673 = vmatprep.subr.mxu0 0.0
        %674 = vmatpush1.msra.mxu0 0.0
        %675 = vmatprep.subr.mxu0 0.0
        %676 = vmatpush1.msra.mxu0 0.0
        %677 = vmatprep.mubr.f32.mxu0 0.0
        %678 = vmatmul.mubr.f32.gmra.mrb[0].mxu0 %v611
        %v679 = vpop.f32.mrb[0].mxu0
        %v680 = vadd.f32 0.0, %v679
        %v681 = vpop.f32.mrb[0].mxu0
        %682 = vdwg.mxu0
        %683 = vst.msk [vmem:[#allocation2] sm:$0xff] %vm521, %v680
        %684 = vrot.lane.b32.xlu0 %v515, 120
        %v685 = vpop.permute.xlu0 %684
        %686 = vrot.lane.b32.xlu0 %v515, 88
        %v687 = vpop.permute.xlu0 %686
        %v688 = vsel %vm521, %v685, 0
        %v690 = vsel %vm521, %v687, 0
        %692 = vmatprep.subr.mxu0 0.0
        %693 = vmatpush1.xpose.msra.mxu0 %v690
        %694 = vmatprep.subr.mxu0 0.0
        %695 = vmatpush1.xpose.msra.mxu0 0.0
        %696 = vmatprep.subr.mxu0 0.0
        %697 = vmatpush1.xpose.msra.mxu0 0.0
        %698 = vmatprep.subr.mxu0 0.0
        %699 = vmatpush1.xpose.msra.mxu0 0.0
        %700 = vmatprep.subr.mxu0 0.0
        %701 = vmatpush1.xpose.msra.mxu0 0.0
        %702 = vmatprep.subr.mxu0 0.0
        %703 = vmatpush1.xpose.msra.mxu0 0.0
        %704 = vmatprep.subr.mxu0 0.0
        %705 = vmatpush1.xpose.msra.mxu0 0.0
        %706 = vmatprep.subr.mxu0 0.0
        %707 = vmatpush1.xpose.msra.mxu0 0.0
        %708 = vmatprep.subr.mxu0 0.0
        %709 = vmatpush1.xpose.msra.mxu0 0.0
        %710 = vmatprep.subr.mxu0 0.0
        %711 = vmatpush1.xpose.msra.mxu0 0.0
        %712 = vmatprep.subr.mxu0 0.0
        %713 = vmatpush1.xpose.msra.mxu0 0.0
        %714 = vmatprep.subr.mxu0 0.0
        %715 = vmatpush1.xpose.msra.mxu0 0.0
        %716 = vmatprep.subr.mxu0 0.0
        %717 = vmatpush1.xpose.msra.mxu0 0.0
        %718 = vmatprep.subr.mxu0 0.0
        %719 = vmatpush1.xpose.msra.mxu0 0.0
        %720 = vmatprep.subr.mxu0 0.0
        %721 = vmatpush1.xpose.msra.mxu0 0.0
        %722 = vmatprep.subr.mxu0 0.0
        %723 = vmatpush1.xpose.msra.mxu0 0.0
        %724 = vmatprep.subr.mxu0 0.0
        %725 = vmatpush1.xpose.msra.mxu0 0.0
        %726 = vmatprep.subr.mxu0 0.0
        %727 = vmatpush1.xpose.msra.mxu0 0.0
        %728 = vmatprep.subr.mxu0 0.0
        %729 = vmatpush1.xpose.msra.mxu0 0.0
        %730 = vmatprep.subr.mxu0 0.0
        %731 = vmatpush1.xpose.msra.mxu0 0.0
        %732 = vmatprep.subr.mxu0 0.0
        %733 = vmatpush1.xpose.msra.mxu0 0.0
        %734 = vmatprep.subr.mxu0 0.0
        %735 = vmatpush1.xpose.msra.mxu0 0.0
        %736 = vmatprep.subr.mxu0 0.0
        %737 = vmatpush1.xpose.msra.mxu0 0.0
        %738 = vmatprep.subr.mxu0 0.0
        %739 = vmatpush1.xpose.msra.mxu0 0.0
        %740 = vmatprep.subr.mxu0 0.0
        %741 = vmatpush1.xpose.msra.mxu0 0.0
        %742 = vmatprep.subr.mxu0 0.0
        %743 = vmatpush1.xpose.msra.mxu0 0.0
        %744 = vmatprep.subr.mxu0 0.0
        %745 = vmatpush1.xpose.msra.mxu0 0.0
        %746 = vmatprep.subr.mxu0 0.0
        %747 = vmatpush1.xpose.msra.mxu0 0.0
        %748 = vmatprep.subr.mxu0 0.0
        %749 = vmatpush1.xpose.msra.mxu0 0.0
        %750 = vmatprep.subr.mxu0 0.0
        %751 = vmatpush1.xpose.msra.mxu0 0.0
        %752 = vmatprep.subr.mxu0 0.0
        %753 = vmatpush1.xpose.msra.mxu0 0.0
        %754 = vmatprep.subr.mxu0 0.0
        %755 = vmatpush1.xpose.msra.mxu0 0.0
        %756 = vmatprep.mubr.f32.mxu0 0.0
        %757 = vmatmul.mubr.f32.gmra.mrb[0].mxu0 %v688
        %v758 = vpop.f32.mrb[0].mxu0
        %v759 = vadd.f32 0.0, %v758
        %v760 = vpop.f32.mrb[0].mxu0
        %761 = vdwg.mxu0
        %v762 = vsel %vm521, %v759, -inf
        %763 = vmax.xlane.f32.xlu0 %v762
        %v764 = vpop.xlane.xlu0 %763
        %v765 = vsub.f32 %v759, %v764
        %v766 = vmul.f32 %v765, 1.442695
        %v767 = vpow.pop %v766
        %v768 = vsel %vm521, %v767, 0.0
        %769 = vadd.xlane.f32.xlu0 %v768
        %v770 = vpop.xlane.xlu0 %769
        %v771 = vrcp.pop %v770
        %v772 = vmul.f32 %v767, %v771
        %773 = vrot.lane.b32.xlu0 %v515, 56
        %v774 = vpop.permute.xlu0 %773
        %v777 = vsel %vm521, %v772, 0
        %779 = vmatprep.subr.mxu0 0.0
        %780 = vmatpush1.msra.mxu0 %v774
        %781 = vmatprep.subr.mxu0 0.0
        %782 = vmatpush1.msra.mxu0 0.0
        %783 = vmatprep.subr.mxu0 0.0
        %784 = vmatpush1.msra.mxu0 0.0
        %785 = vmatprep.subr.mxu0 0.0
        %786 = vmatpush1.msra.mxu0 0.0
        %787 = vmatprep.subr.mxu0 0.0
        %788 = vmatpush1.msra.mxu0 0.0
        %789 = vmatprep.subr.mxu0 0.0
        %790 = vmatpush1.msra.mxu0 0.0
        %791 = vmatprep.subr.mxu0 0.0
        %792 = vmatpush1.msra.mxu0 0.0
        %793 = vmatprep.subr.mxu0 0.0
        %794 = vmatpush1.msra.mxu0 0.0
        %795 = vmatprep.subr.mxu0 0.0
        %796 = vmatpush1.msra.mxu0 0.0
        %797 = vmatprep.subr.mxu0 0.0
        %798 = vmatpush1.msra.mxu0 0.0
        %799 = vmatprep.subr.mxu0 0.0
        %800 = vmatpush1.msra.mxu0 0.0
        %801 = vmatprep.subr.mxu0 0.0
        %802 = vmatpush1.msra.mxu0 0.0
        %803 = vmatprep.subr.mxu0 0.0
        %804 = vmatpush1.msra.mxu0 0.0
        %805 = vmatprep.subr.mxu0 0.0
        %806 = vmatpush1.msra.mxu0 0.0
        %807 = vmatprep.subr.mxu0 0.0
        %808 = vmatpush1.msra.mxu0 0.0
        %809 = vmatprep.subr.mxu0 0.0
        %810 = vmatpush1.msra.mxu0 0.0
        %811 = vmatprep.subr.mxu0 0.0
        %812 = vmatpush1.msra.mxu0 0.0
        %813 = vmatprep.subr.mxu0 0.0
        %814 = vmatpush1.msra.mxu0 0.0
        %815 = vmatprep.subr.mxu0 0.0
        %816 = vmatpush1.msra.mxu0 0.0
        %817 = vmatprep.subr.mxu0 0.0
        %818 = vmatpush1.msra.mxu0 0.0
        %819 = vmatprep.subr.mxu0 0.0
        %820 = vmatpush1.msra.mxu0 0.0
        %821 = vmatprep.subr.mxu0 0.0
        %822 = vmatpush1.msra.mxu0 0.0
        %823 = vmatprep.subr.mxu0 0.0
        %824 = vmatpush1.msra.mxu0 0.0
        %825 = vmatprep.subr.mxu0 0.0
        %826 = vmatpush1.msra.mxu0 0.0
        %827 = vmatprep.subr.mxu0 0.0
        %828 = vmatpush1.msra.mxu0 0.0
        %829 = vmatprep.subr.mxu0 0.0
        %830 = vmatpush1.msra.mxu0 0.0
        %831 = vmatprep.subr.mxu0 0.0
        %832 = vmatpush1.msra.mxu0 0.0
        %833 = vmatprep.subr.mxu0 0.0
        %834 = vmatpush1.msra.mxu0 0.0
        %835 = vmatprep.subr.mxu0 0.0
        %836 = vmatpush1.msra.mxu0 0.0
        %837 = vmatprep.subr.mxu0 0.0
        %838 = vmatpush1.msra.mxu0 0.0
        %839 = vmatprep.subr.mxu0 0.0
        %840 = vmatpush1.msra.mxu0 0.0
        %841 = vmatprep.subr.mxu0 0.0
        %842 = vmatpush1.msra.mxu0 0.0
        %843 = vmatprep.mubr.f32.mxu0 0.0
        %844 = vmatmul.mubr.f32.gmra.mrb[0].mxu0 %v777
        %v845 = vpop.f32.mrb[0].mxu0
        %v846 = vadd.f32 0.0, %v845
        %v847 = vpop.f32.mrb[0].mxu0
        %848 = vdwg.mxu0
        %850 = vrot.lane.b32.xlu0 %v846, 8
        %v851 = vpop.permute.xlu0 %850
        %vm853 = vcmask 130112
        %854 = vst.msk [vmem:[#allocation2] sm:$0xff] %vm853, %v851
        %855 = vrot.lane.b32.xlu0 %v515, 112
        %v856 = vpop.permute.xlu0 %855
        %857 = vrot.lane.b32.xlu0 %v515, 80
        %v858 = vpop.permute.xlu0 %857
        %v859 = vsel %vm521, %v856, 0
        %v861 = vsel %vm521, %v858, 0
        %863 = vmatprep.subr.mxu0 0.0
        %864 = vmatpush1.xpose.msra.mxu0 %v861
        %865 = vmatprep.subr.mxu0 0.0
        %866 = vmatpush1.xpose.msra.mxu0 0.0
        %867 = vmatprep.subr.mxu0 0.0
        %868 = vmatpush1.xpose.msra.mxu0 0.0
        %869 = vmatprep.subr.mxu0 0.0
        %870 = vmatpush1.xpose.msra.mxu0 0.0
        %871 = vmatprep.subr.mxu0 0.0
        %872 = vmatpush1.xpose.msra.mxu0 0.0
        %873 = vmatprep.subr.mxu0 0.0
        %874 = vmatpush1.xpose.msra.mxu0 0.0
        %875 = vmatprep.subr.mxu0 0.0
        %876 = vmatpush1.xpose.msra.mxu0 0.0
        %877 = vmatprep.subr.mxu0 0.0
        %878 = vmatpush1.xpose.msra.mxu0 0.0
        %879 = vmatprep.subr.mxu0 0.0
        %880 = vmatpush1.xpose.msra.mxu0 0.0
        %881 = vmatprep.subr.mxu0 0.0
        %882 = vmatpush1.xpose.msra.mxu0 0.0
        %883 = vmatprep.subr.mxu0 0.0
        %884 = vmatpush1.xpose.msra.mxu0 0.0
        %885 = vmatprep.subr.mxu0 0.0
        %886 = vmatpush1.xpose.msra.mxu0 0.0
        %887 = vmatprep.subr.mxu0 0.0
        %888 = vmatpush1.xpose.msra.mxu0 0.0
        %889 = vmatprep.subr.mxu0 0.0
        %890 = vmatpush1.xpose.msra.mxu0 0.0
        %891 = vmatprep.subr.mxu0 0.0
        %892 = vmatpush1.xpose.msra.mxu0 0.0
        %893 = vmatprep.subr.mxu0 0.0
        %894 = vmatpush1.xpose.msra.mxu0 0.0
        %895 = vmatprep.subr.mxu0 0.0
        %896 = vmatpush1.xpose.msra.mxu0 0.0
        %897 = vmatprep.subr.mxu0 0.0
        %898 = vmatpush1.xpose.msra.mxu0 0.0
        %899 = vmatprep.subr.mxu0 0.0
        %900 = vmatpush1.xpose.msra.mxu0 0.0
        %901 = vmatprep.subr.mxu0 0.0
        %902 = vmatpush1.xpose.msra.mxu0 0.0
        %903 = vmatprep.subr.mxu0 0.0
        %904 = vmatpush1.xpose.msra.mxu0 0.0
        %905 = vmatprep.subr.mxu0 0.0
        %906 = vmatpush1.xpose.msra.mxu0 0.0
        %907 = vmatprep.subr.mxu0 0.0
        %908 = vmatpush1.xpose.msra.mxu0 0.0
        %909 = vmatprep.subr.mxu0 0.0
        %910 = vmatpush1.xpose.msra.mxu0 0.0
        %911 = vmatprep.subr.mxu0 0.0
        %912 = vmatpush1.xpose.msra.mxu0 0.0
        %913 = vmatprep.subr.mxu0 0.0
        %914 = vmatpush1.xpose.msra.mxu0 0.0
        %915 = vmatprep.subr.mxu0 0.0
        %916 = vmatpush1.xpose.msra.mxu0 0.0
        %917 = vmatprep.subr.mxu0 0.0
        %918 = vmatpush1.xpose.msra.mxu0 0.0
        %919 = vmatprep.subr.mxu0 0.0
        %920 = vmatpush1.xpose.msra.mxu0 0.0
        %921 = vmatprep.subr.mxu0 0.0
        %922 = vmatpush1.xpose.msra.mxu0 0.0
        %923 = vmatprep.subr.mxu0 0.0
        %924 = vmatpush1.xpose.msra.mxu0 0.0
        %925 = vmatprep.subr.mxu0 0.0
        %926 = vmatpush1.xpose.msra.mxu0 0.0
        %927 = vmatprep.mubr.f32.mxu0 0.0
        %928 = vmatmul.mubr.f32.gmra.mrb[0].mxu0 %v859
        %v929 = vpop.f32.mrb[0].mxu0
        %v930 = vadd.f32 0.0, %v929
        %v931 = vpop.f32.mrb[0].mxu0
        %932 = vdwg.mxu0
        %v933 = vsel %vm521, %v930, -inf
        %934 = vmax.xlane.f32.xlu0 %v933
        %v935 = vpop.xlane.xlu0 %934
        %v936 = vsub.f32 %v930, %v935
        %v937 = vmul.f32 %v936, 1.442695
        %v938 = vpow.pop %v937
        %v939 = vsel %vm521, %v938, 0.0
        %940 = vadd.xlane.f32.xlu0 %v939
        %v941 = vpop.xlane.xlu0 %940
        %v942 = vrcp.pop %v941
        %v943 = vmul.f32 %v938, %v942
        %944 = vrot.lane.b32.xlu0 %v515, 48
        %v945 = vpop.permute.xlu0 %944
        %v948 = vsel %vm521, %v943, 0
        %950 = vmatprep.subr.mxu0 0.0
        %951 = vmatpush1.msra.mxu0 %v945
        %952 = vmatprep.subr.mxu0 0.0
        %953 = vmatpush1.msra.mxu0 0.0
        %954 = vmatprep.subr.mxu0 0.0
        %955 = vmatpush1.msra.mxu0 0.0
        %956 = vmatprep.subr.mxu0 0.0
        %957 = vmatpush1.msra.mxu0 0.0
        %958 = vmatprep.subr.mxu0 0.0
        %959 = vmatpush1.msra.mxu0 0.0
        %960 = vmatprep.subr.mxu0 0.0
        %961 = vmatpush1.msra.mxu0 0.0
        %962 = vmatprep.subr.mxu0 0.0
        %963 = vmatpush1.msra.mxu0 0.0
        %964 = vmatprep.subr.mxu0 0.0
        %965 = vmatpush1.msra.mxu0 0.0
        %966 = vmatprep.subr.mxu0 0.0
        %967 = vmatpush1.msra.mxu0 0.0
        %968 = vmatprep.subr.mxu0 0.0
        %969 = vmatpush1.msra.mxu0 0.0
        %970 = vmatprep.subr.mxu0 0.0
        %971 = vmatpush1.msra.mxu0 0.0
        %972 = vmatprep.subr.mxu0 0.0
        %973 = vmatpush1.msra.mxu0 0.0
        %974 = vmatprep.subr.mxu0 0.0
        %975 = vmatpush1.msra.mxu0 0.0
        %976 = vmatprep.subr.mxu0 0.0
        %977 = vmatpush1.msra.mxu0 0.0
        %978 = vmatprep.subr.mxu0 0.0
        %979 = vmatpush1.msra.mxu0 0.0
        %980 = vmatprep.subr.mxu0 0.0
        %981 = vmatpush1.msra.mxu0 0.0
        %982 = vmatprep.subr.mxu0 0.0
        %983 = vmatpush1.msra.mxu0 0.0
        %984 = vmatprep.subr.mxu0 0.0
        %985 = vmatpush1.msra.mxu0 0.0
        %986 = vmatprep.subr.mxu0 0.0
        %987 = vmatpush1.msra.mxu0 0.0
        %988 = vmatprep.subr.mxu0 0.0
        %989 = vmatpush1.msra.mxu0 0.0
        %990 = vmatprep.subr.mxu0 0.0
        %991 = vmatpush1.msra.mxu0 0.0
        %992 = vmatprep.subr.mxu0 0.0
        %993 = vmatpush1.msra.mxu0 0.0
        %994 = vmatprep.subr.mxu0 0.0
        %995 = vmatpush1.msra.mxu0 0.0
        %996 = vmatprep.subr.mxu0 0.0
        %997 = vmatpush1.msra.mxu0 0.0
        %998 = vmatprep.subr.mxu0 0.0
        %999 = vmatpush1.msra.mxu0 0.0
        %1000 = vmatprep.subr.mxu0 0.0
        %1001 = vmatpush1.msra.mxu0 0.0
        %1002 = vmatprep.subr.mxu0 0.0
        %1003 = vmatpush1.msra.mxu0 0.0
        %1004 = vmatprep.subr.mxu0 0.0
        %1005 = vmatpush1.msra.mxu0 0.0
        %1006 = vmatprep.subr.mxu0 0.0
        %1007 = vmatpush1.msra.mxu0 0.0
        %1008 = vmatprep.subr.mxu0 0.0
        %1009 = vmatpush1.msra.mxu0 0.0
        %1010 = vmatprep.subr.mxu0 0.0
        %1011 = vmatpush1.msra.mxu0 0.0
        %1012 = vmatprep.subr.mxu0 0.0
        %1013 = vmatpush1.msra.mxu0 0.0
        %1014 = vmatprep.mubr.f32.mxu0 0.0
        %1015 = vmatmul.mubr.f32.gmra.mrb[0].mxu0 %v948
        %v1016 = vpop.f32.mrb[0].mxu0
        %v1017 = vadd.f32 0.0, %v1016
        %v1018 = vpop.f32.mrb[0].mxu0
        %1019 = vdwg.mxu0
        %1021 = vrot.lane.b32.xlu0 %v1017, 16
        %v1022 = vpop.permute.xlu0 %1021
        %vm1024 = vcmask 195712
        %1025 = vst.msk [vmem:[#allocation2] sm:$0xff] %vm1024, %v1022
        %1026 = vrot.lane.b32.xlu0 %v515, 104
        %v1027 = vpop.permute.xlu0 %1026
        %1028 = vrot.lane.b32.xlu0 %v515, 72
        %v1029 = vpop.permute.xlu0 %1028
        %v1030 = vsel %vm521, %v1027, 0
        %v1032 = vsel %vm521, %v1029, 0
        %1034 = vmatprep.subr.mxu0 0.0
        %1035 = vmatpush1.xpose.msra.mxu0 %v1032
        %1036 = vmatprep.subr.mxu0 0.0
        %1037 = vmatpush1.xpose.msra.mxu0 0.0
        %1038 = vmatprep.subr.mxu0 0.0
        %1039 = vmatpush1.xpose.msra.mxu0 0.0
        %1040 = vmatprep.subr.mxu0 0.0
        %1041 = vmatpush1.xpose.msra.mxu0 0.0
        %1042 = vmatprep.subr.mxu0 0.0
        %1043 = vmatpush1.xpose.msra.mxu0 0.0
        %1044 = vmatprep.subr.mxu0 0.0
        %1045 = vmatpush1.xpose.msra.mxu0 0.0
        %1046 = vmatprep.subr.mxu0 0.0
        %1047 = vmatpush1.xpose.msra.mxu0 0.0
        %1048 = vmatprep.subr.mxu0 0.0
        %1049 = vmatpush1.xpose.msra.mxu0 0.0
        %1050 = vmatprep.subr.mxu0 0.0
        %1051 = vmatpush1.xpose.msra.mxu0 0.0
        %1052 = vmatprep.subr.mxu0 0.0
        %1053 = vmatpush1.xpose.msra.mxu0 0.0
        %1054 = vmatprep.subr.mxu0 0.0
        %1055 = vmatpush1.xpose.msra.mxu0 0.0
        %1056 = vmatprep.subr.mxu0 0.0
        %1057 = vmatpush1.xpose.msra.mxu0 0.0
        %1058 = vmatprep.subr.mxu0 0.0
        %1059 = vmatpush1.xpose.msra.mxu0 0.0
        %1060 = vmatprep.subr.mxu0 0.0
        %1061 = vmatpush1.xpose.msra.mxu0 0.0
        %1062 = vmatprep.subr.mxu0 0.0
        %1063 = vmatpush1.xpose.msra.mxu0 0.0
        %1064 = vmatprep.subr.mxu0 0.0
        %1065 = vmatpush1.xpose.msra.mxu0 0.0
        %1066 = vmatprep.subr.mxu0 0.0
        %1067 = vmatpush1.xpose.msra.mxu0 0.0
        %1068 = vmatprep.subr.mxu0 0.0
        %1069 = vmatpush1.xpose.msra.mxu0 0.0
        %1070 = vmatprep.subr.mxu0 0.0
        %1071 = vmatpush1.xpose.msra.mxu0 0.0
        %1072 = vmatprep.subr.mxu0 0.0
        %1073 = vmatpush1.xpose.msra.mxu0 0.0
        %1074 = vmatprep.subr.mxu0 0.0
        %1075 = vmatpush1.xpose.msra.mxu0 0.0
        %1076 = vmatprep.subr.mxu0 0.0
        %1077 = vmatpush1.xpose.msra.mxu0 0.0
        %1078 = vmatprep.subr.mxu0 0.0
        %1079 = vmatpush1.xpose.msra.mxu0 0.0
        %1080 = vmatprep.subr.mxu0 0.0
        %1081 = vmatpush1.xpose.msra.mxu0 0.0
        %1082 = vmatprep.subr.mxu0 0.0
        %1083 = vmatpush1.xpose.msra.mxu0 0.0
        %1084 = vmatprep.subr.mxu0 0.0
        %1085 = vmatpush1.xpose.msra.mxu0 0.0
        %1086 = vmatprep.subr.mxu0 0.0
        %1087 = vmatpush1.xpose.msra.mxu0 0.0
        %1088 = vmatprep.subr.mxu0 0.0
        %1089 = vmatpush1.xpose.msra.mxu0 0.0
        %1090 = vmatprep.subr.mxu0 0.0
        %1091 = vmatpush1.xpose.msra.mxu0 0.0
        %1092 = vmatprep.subr.mxu0 0.0
        %1093 = vmatpush1.xpose.msra.mxu0 0.0
        %1094 = vmatprep.subr.mxu0 0.0
        %1095 = vmatpush1.xpose.msra.mxu0 0.0
        %1096 = vmatprep.subr.mxu0 0.0
        %1097 = vmatpush1.xpose.msra.mxu0 0.0
        %1098 = vmatprep.mubr.f32.mxu0 0.0
        %1099 = vmatmul.mubr.f32.gmra.mrb[0].mxu0 %v1030
        %v1100 = vpop.f32.mrb[0].mxu0
        %v1101 = vadd.f32 0.0, %v1100
        %v1102 = vpop.f32.mrb[0].mxu0
        %1103 = vdwg.mxu0
        %v1104 = vsel %vm521, %v1101, -inf
        %1105 = vmax.xlane.f32.xlu0 %v1104
        %v1106 = vpop.xlane.xlu0 %1105
        %v1107 = vsub.f32 %v1101, %v1106
        %v1108 = vmul.f32 %v1107, 1.442695
        %v1109 = vpow.pop %v1108
        %v1110 = vsel %vm521, %v1109, 0.0
        %1111 = vadd.xlane.f32.xlu0 %v1110
        %v1112 = vpop.xlane.xlu0 %1111
        %v1113 = vrcp.pop %v1112
        %v1114 = vmul.f32 %v1109, %v1113
        %1115 = vrot.lane.b32.xlu0 %v515, 40
        %v1116 = vpop.permute.xlu0 %1115
        %v1119 = vsel %vm521, %v1114, 0
        %1121 = vmatprep.subr.mxu0 0.0
        %1122 = vmatpush1.msra.mxu0 %v1116
        %1123 = vmatprep.subr.mxu0 0.0
        %1124 = vmatpush1.msra.mxu0 0.0
        %1125 = vmatprep.subr.mxu0 0.0
        %1126 = vmatpush1.msra.mxu0 0.0
        %1127 = vmatprep.subr.mxu0 0.0
        %1128 = vmatpush1.msra.mxu0 0.0
        %1129 = vmatprep.subr.mxu0 0.0
        %1130 = vmatpush1.msra.mxu0 0.0
        %1131 = vmatprep.subr.mxu0 0.0
        %1132 = vmatpush1.msra.mxu0 0.0
        %1133 = vmatprep.subr.mxu0 0.0
        %1134 = vmatpush1.msra.mxu0 0.0
        %1135 = vmatprep.subr.mxu0 0.0
        %1136 = vmatpush1.msra.mxu0 0.0
        %1137 = vmatprep.subr.mxu0 0.0
        %1138 = vmatpush1.msra.mxu0 0.0
        %1139 = vmatprep.subr.mxu0 0.0
        %1140 = vmatpush1.msra.mxu0 0.0
        %1141 = vmatprep.subr.mxu0 0.0
        %1142 = vmatpush1.msra.mxu0 0.0
        %1143 = vmatprep.subr.mxu0 0.0
        %1144 = vmatpush1.msra.mxu0 0.0
        %1145 = vmatprep.subr.mxu0 0.0
        %1146 = vmatpush1.msra.mxu0 0.0
        %1147 = vmatprep.subr.mxu0 0.0
        %1148 = vmatpush1.msra.mxu0 0.0
        %1149 = vmatprep.subr.mxu0 0.0
        %1150 = vmatpush1.msra.mxu0 0.0
        %1151 = vmatprep.subr.mxu0 0.0
        %1152 = vmatpush1.msra.mxu0 0.0
        %1153 = vmatprep.subr.mxu0 0.0
        %1154 = vmatpush1.msra.mxu0 0.0
        %1155 = vmatprep.subr.mxu0 0.0
        %1156 = vmatpush1.msra.mxu0 0.0
        %1157 = vmatprep.subr.mxu0 0.0
        %1158 = vmatpush1.msra.mxu0 0.0
        %1159 = vmatprep.subr.mxu0 0.0
        %1160 = vmatpush1.msra.mxu0 0.0
        %1161 = vmatprep.subr.mxu0 0.0
        %1162 = vmatpush1.msra.mxu0 0.0
        %1163 = vmatprep.subr.mxu0 0.0
        %1164 = vmatpush1.msra.mxu0 0.0
        %1165 = vmatprep.subr.mxu0 0.0
        %1166 = vmatpush1.msra.mxu0 0.0
        %1167 = vmatprep.subr.mxu0 0.0
        %1168 = vmatpush1.msra.mxu0 0.0
        %1169 = vmatprep.subr.mxu0 0.0
        %1170 = vmatpush1.msra.mxu0 0.0
        %1171 = vmatprep.subr.mxu0 0.0
        %1172 = vmatpush1.msra.mxu0 0.0
        %1173 = vmatprep.subr.mxu0 0.0
        %1174 = vmatpush1.msra.mxu0 0.0
        %1175 = vmatprep.subr.mxu0 0.0
        %1176 = vmatpush1.msra.mxu0 0.0
        %1177 = vmatprep.subr.mxu0 0.0
        %1178 = vmatpush1.msra.mxu0 0.0
        %1179 = vmatprep.subr.mxu0 0.0
        %1180 = vmatpush1.msra.mxu0 0.0
        %1181 = vmatprep.subr.mxu0 0.0
        %1182 = vmatpush1.msra.mxu0 0.0
        %1183 = vmatprep.subr.mxu0 0.0
        %1184 = vmatpush1.msra.mxu0 0.0
        %1185 = vmatprep.mubr.f32.mxu0 0.0
        %1186 = vmatmul.mubr.f32.gmra.mrb[0].mxu0 %v1119
        %v1187 = vpop.f32.mrb[0].mxu0
        %v1188 = vadd.f32 0.0, %v1187
        %v1189 = vpop.f32.mrb[0].mxu0
        %1190 = vdwg.mxu0
        %1192 = vrot.lane.b32.xlu0 %v1188, 24
        %v1193 = vpop.permute.xlu0 %1192
        %vm1195 = vcmask 261312
        %1196 = vst.msk [vmem:[#allocation2] sm:$0xff] %vm1195, %v1193
        %v1197 = vld [vmem:[#allocation2] sm:$0xff]
        %v1198 = vld [vmem:[%s4] sm:$0xff]
        %v1199 = vld [vmem:[%s4 + $0x8] sm:$0xff]
        %v1200 = vld [vmem:[%s4 + $0x10] sm:$0xff]
        %v1201 = vld [vmem:[%s4 + $0x18] sm:$0xff]
        %v1202 = vld [vmem:[%s5] sm:$0x1]
        %v1204 = vlaneseq
        %v1205 = vshrl.u32 %v1204, 7
        %v1206 = vsub.s32 0, %v1205
        %v1207 = vrot.slane %v1202, %v1206
        %v1210 = vsel %vm412, %v1197, 0
        %1212 = vmatprep.subr.mxu0 0.0
        %1213 = vmatpush1.msra.mxu0 %v1198
        %1214 = vmatprep.subr.mxu0 0.0
        %1215 = vmatpush1.msra.mxu0 %v1199
        %1216 = vmatprep.subr.mxu0 0.0
        %1217 = vmatpush1.msra.mxu0 %v1200
        %1218 = vmatprep.subr.mxu0 0.0
        %1219 = vmatpush1.msra.mxu0 %v1201
        %1220 = vmatprep.subr.mxu0 0.0
        %1221 = vmatpush1.msra.mxu0 0.0
        %1222 = vmatprep.subr.mxu0 0.0
        %1223 = vmatpush1.msra.mxu0 0.0
        %1224 = vmatprep.subr.mxu0 0.0
        %1225 = vmatpush1.msra.mxu0 0.0
        %1226 = vmatprep.subr.mxu0 0.0
        %1227 = vmatpush1.msra.mxu0 0.0
        %1228 = vmatprep.subr.mxu0 0.0
        %1229 = vmatpush1.msra.mxu0 0.0
        %1230 = vmatprep.subr.mxu0 0.0
        %1231 = vmatpush1.msra.mxu0 0.0
        %1232 = vmatprep.subr.mxu0 0.0
        %1233 = vmatpush1.msra.mxu0 0.0
        %1234 = vmatprep.subr.mxu0 0.0
        %1235 = vmatpush1.msra.mxu0 0.0
        %1236 = vmatprep.subr.mxu0 0.0
        %1237 = vmatpush1.msra.mxu0 0.0
        %1238 = vmatprep.subr.mxu0 0.0
        %1239 = vmatpush1.msra.mxu0 0.0
        %1240 = vmatprep.subr.mxu0 0.0
        %1241 = vmatpush1.msra.mxu0 0.0
        %1242 = vmatprep.subr.mxu0 0.0
        %1243 = vmatpush1.msra.mxu0 0.0
        %1244 = vmatprep.subr.mxu0 0.0
        %1245 = vmatpush1.msra.mxu0 0.0
        %1246 = vmatprep.subr.mxu0 0.0
        %1247 = vmatpush1.msra.mxu0 0.0
        %1248 = vmatprep.subr.mxu0 0.0
        %1249 = vmatpush1.msra.mxu0 0.0
        %1250 = vmatprep.subr.mxu0 0.0
        %1251 = vmatpush1.msra.mxu0 0.0
        %1252 = vmatprep.subr.mxu0 0.0
        %1253 = vmatpush1.msra.mxu0 0.0
        %1254 = vmatprep.subr.mxu0 0.0
        %1255 = vmatpush1.msra.mxu0 0.0
        %1256 = vmatprep.subr.mxu0 0.0
        %1257 = vmatpush1.msra.mxu0 0.0
        %1258 = vmatprep.subr.mxu0 0.0
        %1259 = vmatpush1.msra.mxu0 0.0
        %1260 = vmatprep.subr.mxu0 0.0
        %1261 = vmatpush1.msra.mxu0 0.0
        %1262 = vmatprep.subr.mxu0 0.0
        %1263 = vmatpush1.msra.mxu0 0.0
        %1264 = vmatprep.subr.mxu0 0.0
        %1265 = vmatpush1.msra.mxu0 0.0
        %1266 = vmatprep.subr.mxu0 0.0
        %1267 = vmatpush1.msra.mxu0 0.0
        %1268 = vmatprep.subr.mxu0 0.0
        %1269 = vmatpush1.msra.mxu0 0.0
        %1270 = vmatprep.subr.mxu0 0.0
        %1271 = vmatpush1.msra.mxu0 0.0
        %1272 = vmatprep.subr.mxu0 0.0
        %1273 = vmatpush1.msra.mxu0 0.0
        %1274 = vmatprep.subr.mxu0 0.0
        %1275 = vmatpush1.msra.mxu0 0.0
        %1276 = vmatprep.mubr.f32.mxu0 0.0
        %1277 = vmatmul.mubr.f32.gmra.mrb[0].mxu0 %v1210
        %v1278 = vpop.f32.mrb[0].mxu0
        %v1279 = vadd.f32 %v1207, %v1278
        %v1280 = vpop.f32.mrb[0].mxu0
        %1281 = vdwg.mxu0
        %v1282 = vadd.f32 %v409, %v1279
        %v1283 = vld [vmem:[%s6] sm:$0x1]
        %v1284 = vld [vmem:[%s7] sm:$0x1]
        %v1285 = vsel %vm412, %v1282, 0.0
        %1286 = vadd.xlane.f32.xlu0 %v1285
        %v1287 = vpop.xlane.xlu0 %1286
        %v1288 = vmul.f32 %v1287, %v416
        %v1289 = vsub.f32 %v1282, %v1288
        %v1290 = vmul.f32 %v1289, %v1289
        %v1291 = vsel %vm412, %v1290, 0.0
        %1292 = vadd.xlane.f32.xlu0 %v1291
        %v1293 = vpop.xlane.xlu0 %1292
        %v1294 = vmul.f32 %v1293, %v416
        %v1295 = vadd.f32 %v1294, 1e-05
        %v1296 = vrsqrt.pop %v1295
        %v1297 = vmul.f32 %v1289, %v1296
        %v1299 = vlaneseq
        %v1300 = vshrl.u32 %v1299, 7
        %v1301 = vsub.s32 0, %v1300
        %v1302 = vrot.slane %v1283, %v1301
        %v1304 = vmul.f32 %v1297, %v1302
        %v1306 = vlaneseq
        %v1307 = vshrl.u32 %v1306, 7
        %v1308 = vsub.s32 0, %v1307
        %v1309 = vrot.slane %v1284, %v1308
        %v1311 = vadd.f32 %v1304, %v1309
        %v1312 = vld [vmem:[%s8] sm:$0xff]
        %v1313 = vld [vmem:[%s8 + $0x8] sm:$0xff]
        %v1314 = vld [vmem:[%s8 + $0x10] sm:$0xff]
        %v1315 = vld [vmem:[%s8 + $0x18] sm:$0xff]
        %v1316 = vld [vmem:[%s9] sm:$0x1]
        %v1318 = vlaneseq
        %v1319 = vshrl.u32 %v1318, 7
        %v1320 = vsub.s32 0, %v1319
        %v1321 = vrot.slane %v1316, %v1320
        %v1324 = vsel %vm412, %v1311, 0
        %1326 = vmatprep.subr.mxu0 0.0
        %1327 = vmatpush1.msra.mxu0 %v1312
        %1328 = vmatprep.subr.mxu0 0.0
        %1329 = vmatpush1.msra.mxu0 %v1313
        %1330 = vmatprep.subr.mxu0 0.0
        %1331 = vmatpush1.msra.mxu0 %v1314
        %1332 = vmatprep.subr.mxu0 0.0
        %1333 = vmatpush1.msra.mxu0 %v1315
        %1334 = vmatprep.subr.mxu0 0.0
        %1335 = vmatpush1.msra.mxu0 0.0
        %1336 = vmatprep.subr.mxu0 0.0
        %1337 = vmatpush1.msra.mxu0 0.0
        %1338 = vmatprep.subr.mxu0 0.0
        %1339 = vmatpush1.msra.mxu0 0.0
        %1340 = vmatprep.subr.mxu0 0.0
        %1341 = vmatpush1.msra.mxu0 0.0
        %1342 = vmatprep.subr.mxu0 0.0
        %1343 = vmatpush1.msra.mxu0 0.0
        %1344 = vmatprep.subr.mxu0 0.0
        %1345 = vmatpush1.msra.mxu0 0.0
        %1346 = vmatprep.subr.mxu0 0.0
        %1347 = vmatpush1.msra.mxu0 0.0
        %1348 = vmatprep.subr.mxu0 0.0
        %1349 = vmatpush1.msra.mxu0 0.0
        %1350 = vmatprep.subr.mxu0 0.0
        %1351 = vmatpush1.msra.mxu0 0.0
        %1352 = vmatprep.subr.mxu0 0.0
        %1353 = vmatpush1.msra.mxu0 0.0
        %1354 = vmatprep.subr.mxu0 0.0
        %1355 = vmatpush1.msra.mxu0 0.0
        %1356 = vmatprep.subr.mxu0 0.0
        %1357 = vmatpush1.msra.mxu0 0.0
        %1358 = vmatprep.subr.mxu0 0.0
        %1359 = vmatpush1.msra.mxu0 0.0
        %1360 = vmatprep.subr.mxu0 0.0
        %1361 = vmatpush1.msra.mxu0 0.0
        %1362 = vmatprep.subr.mxu0 0.0
        %1363 = vmatpush1.msra.mxu0 0.0
        %1364 = vmatprep.subr.mxu0 0.0
        %1365 = vmatpush1.msra.mxu0 0.0
        %1366 = vmatprep.subr.mxu0 0.0
        %1367 = vmatpush1.msra.mxu0 0.0
        %1368 = vmatprep.subr.mxu0 0.0
        %1369 = vmatpush1.msra.mxu0 0.0
        %1370 = vmatprep.subr.mxu0 0.0
        %1371 = vmatpush1.msra.mxu0 0.0
        %1372 = vmatprep.subr.mxu0 0.0
        %1373 = vmatpush1.msra.mxu0 0.0
        %1374 = vmatprep.subr.mxu0 0.0
        %1375 = vmatpush1.msra.mxu0 0.0
        %1376 = vmatprep.subr.mxu0 0.0
        %1377 = vmatpush1.msra.mxu0 0.0
        %1378 = vmatprep.subr.mxu0 0.0
        %1379 = vmatpush1.msra.mxu0 0.0
        %1380 = vmatprep.subr.mxu0 0.0
        %1381 = vmatpush1.msra.mxu0 0.0
        %1382 = vmatprep.subr.mxu0 0.0
        %1383 = vmatpush1.msra.mxu0 0.0
        %1384 = vmatprep.subr.mxu0 0.0
        %1385 = vmatpush1.msra.mxu0 0.0
        %1386 = vmatprep.subr.mxu0 0.0
        %1387 = vmatpush1.msra.mxu0 0.0
        %1388 = vmatprep.subr.mxu0 0.0
        %1389 = vmatpush1.msra.mxu0 0.0
        %1390 = vmatprep.mubr.f32.mxu0 0.0
        %1391 = vmatmul.mubr.f32.gmra.mrb[0].mxu0 %v1324
        %v1392 = vpop.f32.mrb[0].mxu0
        %v1393 = vadd.f32 %v1321, %v1392
        %v1394 = vpop.f32.mrb[0].mxu0
        %1395 = vdwg.mxu0
        %v1396 = vmul.f32 %v1393, 0.5
        %v1397 = vmul.f32 %v1393, 0.70710677
        %v1398 = verf.f32.pop %v1397
        %v1399 = vadd.f32 %v1398, 1.0
        %v1400 = vmul.f32 %v1396, %v1399
        %v1401 = vld [vmem:[%s10] sm:$0xff]
        %v1402 = vld [vmem:[%s10 + $0x8] sm:$0xff]
        %v1403 = vld [vmem:[%s10 + $0x10] sm:$0xff]
        %v1404 = vld [vmem:[%s10 + $0x18] sm:$0xff]
        %v1405 = vld [vmem:[%s10 + $0x20] sm:$0xff]
        %v1406 = vld [vmem:[%s10 + $0x28] sm:$0xff]
        %v1407 = vld [vmem:[%s10 + $0x30] sm:$0xff]
        %v1408 = vld [vmem:[%s10 + $0x38] sm:$0xff]
        %v1409 = vld [vmem:[%s10 + $0x40] sm:$0xff]
        %v1410 = vld [vmem:[%s10 + $0x48] sm:$0xff]
        %v1411 = vld [vmem:[%s10 + $0x50] sm:$0xff]
        %v1412 = vld [vmem:[%s10 + $0x58] sm:$0xff]
        %v1413 = vld [vmem:[%s10 + $0x60] sm:$0xff]
        %v1414 = vld [vmem:[%s10 + $0x68] sm:$0xff]
        %v1415 = vld [vmem:[%s10 + $0x70] sm:$0xff]
        %v1416 = vld [vmem:[%s10 + $0x78] sm:$0xff]
        %v1417 = vld [vmem:[%s11] sm:$0x1]
        %v1419 = vlaneseq
        %v1420 = vshrl.u32 %v1419, 7
        %v1421 = vsub.s32 0, %v1420
        %v1422 = vrot.slane %v1417, %v1421
        %1424 = vmatprep.subr.mxu0 0.0
        %1425 = vmatpush1.msra.mxu0 %v1401
        %1426 = vmatprep.subr.mxu0 0.0
        %1427 = vmatpush1.msra.mxu0 %v1402
        %1428 = vmatprep.subr.mxu0 0.0
        %1429 = vmatpush1.msra.mxu0 %v1403
        %1430 = vmatprep.subr.mxu0 0.0
        %1431 = vmatpush1.msra.mxu0 %v1404
        %1432 = vmatprep.subr.mxu0 0.0
        %1433 = vmatpush1.msra.mxu0 %v1405
        %1434 = vmatprep.subr.mxu0 0.0
        %1435 = vmatpush1.msra.mxu0 %v1406
        %1436 = vmatprep.subr.mxu0 0.0
        %1437 = vmatpush1.msra.mxu0 %v1407
        %1438 = vmatprep.subr.mxu0 0.0
        %1439 = vmatpush1.msra.mxu0 %v1408
        %1440 = vmatprep.subr.mxu0 0.0
        %1441 = vmatpush1.msra.mxu0 %v1409
        %1442 = vmatprep.subr.mxu0 0.0
        %1443 = vmatpush1.msra.mxu0 %v1410
        %1444 = vmatprep.subr.mxu0 0.0
        %1445 = vmatpush1.msra.mxu0 %v1411
        %1446 = vmatprep.subr.mxu0 0.0
        %1447 = vmatpush1.msra.mxu0 %v1412
        %1448 = vmatprep.subr.mxu0 0.0
        %1449 = vmatpush1.msra.mxu0 %v1413
        %1450 = vmatprep.subr.mxu0 0.0
        %1451 = vmatpush1.msra.mxu0 %v1414
        %1452 = vmatprep.subr.mxu0 0.0
        %1453 = vmatpush1.msra.mxu0 %v1415
        %1454 = vmatprep.subr.mxu0 0.0
        %1455 = vmatpush1.msra.mxu0 %v1416
        %1456 = vmatprep.subr.mxu0 0.0
        %1457 = vmatpush1.msra.mxu0 0.0
        %1458 = vmatprep.subr.mxu0 0.0
        %1459 = vmatpush1.msra.mxu0 0.0
        %1460 = vmatprep.subr.mxu0 0.0
        %1461 = vmatpush1.msra.mxu0 0.0
        %1462 = vmatprep.subr.mxu0 0.0
        %1463 = vmatpush1.msra.mxu0 0.0
        %1464 = vmatprep.subr.mxu0 0.0
        %1465 = vmatpush1.msra.mxu0 0.0
        %1466 = vmatprep.subr.mxu0 0.0
        %1467 = vmatpush1.msra.mxu0 0.0
        %1468 = vmatprep.subr.mxu0 0.0
        %1469 = vmatpush1.msra.mxu0 0.0
        %1470 = vmatprep.subr.mxu0 0.0
        %1471 = vmatpush1.msra.mxu0 0.0
        %1472 = vmatprep.subr.mxu0 0.0
        %1473 = vmatpush1.msra.mxu0 0.0
        %1474 = vmatprep.subr.mxu0 0.0
        %1475 = vmatpush1.msra.mxu0 0.0
        %1476 = vmatprep.subr.mxu0 0.0
        %1477 = vmatpush1.msra.mxu0 0.0
        %1478 = vmatprep.subr.mxu0 0.0
        %1479 = vmatpush1.msra.mxu0 0.0
        %1480 = vmatprep.subr.mxu0 0.0
        %1481 = vmatpush1.msra.mxu0 0.0
        %1482 = vmatprep.subr.mxu0 0.0
        %1483 = vmatpush1.msra.mxu0 0.0
        %1484 = vmatprep.subr.mxu0 0.0
        %1485 = vmatpush1.msra.mxu0 0.0
        %1486 = vmatprep.subr.mxu0 0.0
        %1487 = vmatpush1.msra.mxu0 0.0
        %1488 = vmatprep.mubr.f32.mxu0 0.0
        %1489 = vmatmul.mubr.f32.gmra.mrb[0].mxu0 %v1400
        %v1490 = vpop.f32.mrb[0].mxu0
        %v1491 = vadd.f32 %v1422, %v1490
        %v1492 = vpop.f32.mrb[0].mxu0
        %1493 = vdwg.mxu0
        %v1494 = vadd.f32 %v1282, %v1491
        %1495 = vst.msk [vmem:[%s404] sm:$0xff] %vm412, %v1494
        %s1496 = sand.u32 %s291, 1
        %s1497 = scalar_lea.sflag [#allocation4], %s1496
        %s1498 = sand.u32 %s291, 1
        %s1499 = smul.addr %s1498, 8
        %s1500 = scalar_lea.vmem [#allocation3], %s1499
        // Predicated region
        $region69: #{tpu_custom_call.1} parent=67 // pred_check
          %p1501 = pneg %p301
        $region70: #{tpu_custom_call.1} parent=67 // pred_check_branch
          %1503 = sbr.rel (%p1501) target = $region72
        $region71: #{tpu_custom_call.1} parent=67 // pred_region
          %s1505 = ssub.s32 128, 128
          %1506 = vsyncadd %s1497, %s1505
          %s1507 = smul.addr %s26, 128
          %s1508 = scalar_lea.hbm %s12, %s1507
          %s1510 = sshll.u32 %s1500, 4
          %s1511 = int_to_ptr.vmem [resolvable:$true] %s1510
          %1513 = dma.vmem_to_hbm [thread:$0]  %s1511, 128, %s1508, %s1497
        $region72: #{tpu_custom_call.1} parent=67 // pred_fallthru
          _
      $region68: #{tpu_custom_call.1} parent=5 // pred_fallthru
        _
      %p1514 = scmp.le.s32.totalorder 2, %s21
      // Predicated region
      $region73: #{tpu_custom_call.1} parent=5 // pred_check
        %p1515 = pneg %p1514
      $region74: #{tpu_custom_call.1} parent=5 // pred_check_branch
        %1517 = sbr.rel (%p1515) target = $region76
      $region75: #{tpu_custom_call.1} parent=5 // pred_region
        %s1518 = ssub.s32 %s21, 2
        // Predicated region
        $region77: #{tpu_custom_call.1} parent=75 // pred_check
          %p1519 = pneg %p307
        $region78: #{tpu_custom_call.1} parent=75 // pred_check_branch
          %1521 = sbr.rel (%p1519) target = $region80
        $region79: #{tpu_custom_call.1} parent=75 // pred_region
          %s1522 = sand.u32 %s292, 1
          %s1523 = scalar_lea.sflag [#allocation4], %s1522
          %s1524 = sand.u32 %s292, 1
          %s1525 = smul.addr %s1524, 8
          %s1526 = scalar_lea.vmem [#allocation3], %s1525
          %1527 = dma.done %s1523, 128
        $region80: #{tpu_custom_call.1} parent=75 // pred_fallthru
          _
      $region76: #{tpu_custom_call.1} parent=5 // pred_fallthru
        _
    $region6: #{tpu_custom_call.1} parent=1 // loop_footer
      %s25 = sadd.s32 1, %s21
    $region7: #{tpu_custom_call.1} parent=1 // loop_footer_branch
      %20 = sbr.rel target = $region3
    $region8: #{tpu_custom_call.1} parent=1 // loop_exit
      _
    %1528 = vsyncpa [#allocation4], 1
    %s1529 = scalar_lea.sflag [#allocation4], 1
    %1530 = vsyncpa %s1529, 1

</llo_original>
